<compile_context>
chip_gen: v7x
topology: tpu7x:2x2x1
jax: 0.10.0
libtpu: 0.0.40
codegen_flags: <defaults>
</compile_context>

<pallas_src>
import functools
import math

import jax
import jax.numpy as jnp
from jax.experimental import pallas as pl
from jax.experimental.pallas import tpu as pltpu

COMPUTE_DTYPE = jnp.bfloat16   # MXU operand dtype (accumulation is always f32)
BIAS_DTYPE = jnp.bfloat16      # dense additive attention-bias storage dtype


def _vmem_limit_bytes():
    # ~56 MiB on v7x (64 MiB physical); capped at 100 MiB on v5e/v6e (128 MiB physical).
    try:
        cap = int(pltpu.get_tpu_info().vmem_capacity_bytes)
    except Exception:
        cap = 64 * 1024 * 1024   # conservative fallback (v7x physical)
    return min(cap * 7 // 8, 100 * 1024 * 1024)


_VMEM_LIMIT = _vmem_limit_bytes()


def _pick_tile(n, candidates):
    for c in candidates:
        if n % c == 0:
            return c
    if n <= 1024:           # small axes: a full-extent block is fine
        return n
    for c in (64, 32, 16, 8):
        if n % c == 0:
            return c
    return n


# ----------------------------- Pallas kernels -----------------------------

def ln_matmul_kernel(x_ref, g_ref, b_ref, w_ref, bias_ref, o_ref, xn_ref, *, relu, eps):
    # LayerNorm fused in front of a tiled matmul.  LN is computed once per row tile
    # (j == 0) into a bf16 VMEM scratch and reused for every output-column tile.
    j = pl.program_id(1)

    @pl.when(j == 0)
    def _layernorm():
        x = x_ref[...].astype(jnp.float32)
        mean = jnp.mean(x, axis=-1, keepdims=True)
        var = jnp.mean(jnp.square(x - mean), axis=-1, keepdims=True)
        xn = (x - mean) * jax.lax.rsqrt(var + eps)
        xn = xn * g_ref[...].astype(jnp.float32) + b_ref[...].astype(jnp.float32)
        xn_ref[...] = xn.astype(xn_ref.dtype)

    y = jnp.dot(xn_ref[...].astype(COMPUTE_DTYPE), w_ref[...].astype(COMPUTE_DTYPE),
                preferred_element_type=jnp.float32)
    y = y + bias_ref[...].astype(jnp.float32)
    if relu:
        y = jnp.maximum(y, 0.0)
    o_ref[...] = y.astype(o_ref.dtype)


def matmul_resid_kernel(x_ref, w_ref, bias_ref, res_ref, o_ref, acc_ref):
    # K-tiled matmul with f32 VMEM accumulator; bias + residual fused into epilogue.
    k = pl.program_id(2)

    @pl.when(k == 0)
    def _init():
        acc_ref[...] = jnp.zeros_like(acc_ref)

    acc_ref[...] += jnp.dot(x_ref[...].astype(COMPUTE_DTYPE),
                            w_ref[...].astype(COMPUTE_DTYPE),
                            preferred_element_type=jnp.float32)

    @pl.when(k == pl.num_programs(2) - 1)
    def _flush():
        o_ref[...] = (acc_ref[...]
                      + bias_ref[...].astype(jnp.float32)
                      + res_ref[...].astype(jnp.float32)).astype(o_ref.dtype)


def attn_kernel(*refs, heads, scale, has_bias):
    # grid = (B, q_tiles, k_tiles), k innermost ('arbitrary').  Q/K/V arrive head-major
    # (heads, tile, D): per-head slices are cheap leading-axis slices (no lane slicing).
    if has_bias:
        (q_ref, k_ref, v_ref, bias_ref, wo_ref, bo_ref, res_ref,
         o_ref, m_sc, l_sc, acc_sc) = refs
    else:
        (q_ref, k_ref, v_ref, wo_ref, bo_ref, res_ref,
         o_ref, m_sc, l_sc, acc_sc) = refs
        bias_ref = None

    ki = pl.program_id(2)

    @pl.when(ki == 0)
    def _init():
        m_sc[...] = jnp.full_like(m_sc, -1e30)   # finite floor: safe for fully-masked rows
        l_sc[...] = jnp.zeros_like(l_sc)
        acc_sc[...] = jnp.zeros_like(acc_sc)

    q = q_ref[0]   # (heads, tq, D) bf16
    k = k_ref[0]   # (heads, tk, D) bf16
    v = v_ref[0]   # (heads, tk, D) bf16

    for h in range(heads):
        s = jnp.einsum('qd,kd->qk', q[h], k[h],
                       preferred_element_type=jnp.float32) * scale      # (tq, tk) f32
        if has_bias:
            s = s + bias_ref[0, h].astype(jnp.float32)

        m_prev = m_sc[h]                                                # (tq, 1)
        m_new = jnp.maximum(m_prev, jnp.max(s, axis=-1, keepdims=True))
        alpha = jnp.exp(m_prev - m_new)
        p = jnp.exp(s - m_new)
        l_sc[h] = alpha * l_sc[h] + jnp.sum(p, axis=-1, keepdims=True)
        acc_sc[h] = alpha * acc_sc[h] + jnp.dot(p.astype(COMPUTE_DTYPE), v[h],
                                                preferred_element_type=jnp.float32)
        m_sc[h] = m_new

    @pl.when(ki == pl.num_programs(2) - 1)
    def _finalize():
        # Softmax normalization, then ONE (tq,H)@(H,H) Wo matmul + bo bias + residual.
        parts = []
        for h in range(heads):
            inv_l = pl.reciprocal(jnp.maximum(l_sc[h], 1e-30), approx=True)
            parts.append(acc_sc[h] * inv_l)                              # (tq, D) f32
        attn = jnp.concatenate(parts, axis=-1)                           # (tq, H) f32
        out = (res_ref[0].astype(jnp.float32)
               + bo_ref[...].astype(jnp.float32)
               + jnp.dot(attn.astype(COMPUTE_DTYPE), wo_ref[...].astype(COMPUTE_DTYPE),
                         preferred_element_type=jnp.float32))
        o_ref[0] = out.astype(o_ref.dtype)


# ----------------------------- wrappers -----------------------------

def ln_matmul(x, g, b, w, bias, *, relu=False, eps=1e-5, out_dtype=None):
    M, K = x.shape
    N = w.shape[1]
    tm = _pick_tile(M, (512, 256, 128))
    tn = _pick_tile(N, (512, 256, 128))
    grid = (M // tm, N // tn)
    out_dtype = out_dtype or x.dtype
    kernel = functools.partial(ln_matmul_kernel, relu=relu, eps=eps)
    return pl.pallas_call(
        kernel,
        out_shape=jax.ShapeDtypeStruct((M, N), out_dtype),
        grid=grid,
        in_specs=[
            pl.BlockSpec((tm, K), lambda i, j: (i, 0)),
            pl.BlockSpec((1, K), lambda i, j: (0, 0)),
            pl.BlockSpec((1, K), lambda i, j: (0, 0)),
            pl.BlockSpec((K, tn), lambda i, j: (0, j)),
            pl.BlockSpec((1, tn), lambda i, j: (0, j)),
        ],
        out_specs=pl.BlockSpec((tm, tn), lambda i, j: (i, j)),
        scratch_shapes=[pltpu.VMEM((tm, K), COMPUTE_DTYPE)],   # hoisted LN(x) row tile
        compiler_params=pltpu.CompilerParams(
            dimension_semantics=("parallel", "arbitrary"),
            vmem_limit_bytes=_VMEM_LIMIT),
    )(x, g, b, w, bias)


def matmul_bias_residual(x, w, bias, residual, *, out_dtype=None):
    M, K = x.shape
    N = w.shape[1]
    tm = _pick_tile(M, (512, 256, 128))
    tn = _pick_tile(N, (512, 256, 128))
    tk = _pick_tile(K, (512, 256, 128))
    grid = (M // tm, N // tn, K // tk)
    out_dtype = out_dtype or residual.dtype
    return pl.pallas_call(
        matmul_resid_kernel,
        out_shape=jax.ShapeDtypeStruct((M, N), out_dtype),
        grid=grid,
        in_specs=[
            pl.BlockSpec((tm, tk), lambda i, j, k: (i, k)),
            pl.BlockSpec((tk, tn), lambda i, j, k: (k, j)),
            pl.BlockSpec((1, tn), lambda i, j, k: (0, j)),
            pl.BlockSpec((tm, tn), lambda i, j, k: (i, j)),
        ],
        out_specs=pl.BlockSpec((tm, tn), lambda i, j, k: (i, j)),
        scratch_shapes=[pltpu.VMEM((tm, tn), jnp.float32)],
        compiler_params=pltpu.CompilerParams(
            dimension_semantics=("parallel", "parallel", "arbitrary"),
            vmem_limit_bytes=_VMEM_LIMIT),
    )(x, w, bias, residual)


def relative_position_bias(q_hm, pos_emb, scale):
    # Shaw decomposition: P = (q/sqrt(d)) @ pos_emb.T on the MXU, then a (S,S) gather.
    # Stored bf16 to halve HBM traffic / VMEM bias blocks.
    B, heads, S, D = q_hm.shape
    p = jnp.einsum('bhqd,rd->bhqr', q_hm, pos_emb.astype(q_hm.dtype),
                   preferred_element_type=jnp.float32)
    p = (p * scale).astype(BIAS_DTYPE)                               # (B, h, S, num_rel)
    max_rel = (pos_emb.shape[0] - 1) // 2
    pos = jnp.arange(S)
    rel = jnp.clip(pos[None, :] - pos[:, None], -max_rel, max_rel) + max_rel   # (S, S)
    idx = jnp.broadcast_to(rel[None, None], (B, heads, S, S))
    return jnp.take_along_axis(p, idx, axis=-1)                      # (B, h, S, S) bf16


def attention(q_hm, k_hm, v_hm, x_residual, bias, wo, bo, *, heads):
    B, _, S, D = q_hm.shape
    H = heads * D
    tq = _pick_tile(S, (256, 128))
    tk = _pick_tile(S, (512, 256, 128))
    grid = (B, S // tq, S // tk)
    has_bias = bias is not None

    kernel = functools.partial(attn_kernel, heads=heads,
                               scale=1.0 / math.sqrt(D), has_bias=has_bias)

    in_specs = [
        pl.BlockSpec((1, heads, tq, D), lambda b, qi, ki: (b, 0, qi, 0)),   # Q (head-major)
        pl.BlockSpec((1, heads, tk, D), lambda b, qi, ki: (b, 0, ki, 0)),   # K
        pl.BlockSpec((1, heads, tk, D), lambda b, qi, ki: (b, 0, ki, 0)),   # V
    ]
    args = [q_hm, k_hm, v_hm]
    if has_bias:
        in_specs.append(pl.BlockSpec((1, heads, tq, tk), lambda b, qi, ki: (b, 0, qi, ki)))
        args.append(bias)
    in_specs += [
        pl.BlockSpec((H, H), lambda b, qi, ki: (0, 0)),               # Wo
        pl.BlockSpec((1, H), lambda b, qi, ki: (0, 0)),               # bo
        pl.BlockSpec((1, tq, H), lambda b, qi, ki: (b, qi, 0)),       # residual (= layer input)
    ]
    args += [wo, bo, x_residual]

    return pl.pallas_call(
        kernel,
        out_shape=jax.ShapeDtypeStruct((B, S, H), x_residual.dtype),
        grid=grid,
        in_specs=in_specs,
        out_specs=pl.BlockSpec((1, tq, H), lambda b, qi, ki: (b, qi, 0)),
        scratch_shapes=[
            pltpu.VMEM((heads, tq, 1), jnp.float32),   # running max
            pltpu.VMEM((heads, tq, 1), jnp.float32),   # running sum
            pltpu.VMEM((heads, tq, D), jnp.float32),   # running PV accumulator
        ],
        compiler_params=pltpu.CompilerParams(
            dimension_semantics=("parallel", "parallel", "arbitrary"),
            vmem_limit_bytes=_VMEM_LIMIT),
    )(*args)


# ----------------------------- encoder layer forward -----------------------------

def encoder_layer_forward(params, x, padding_mask=None, *, heads, relposenc=True):
    B, S, H = x.shape
    D = H // heads
    M = B * S
    cd = COMPUTE_DTYPE
    x2d = x.reshape(M, H)

    # Pre-cast the big weights once: halves their HBM streaming, MXU runs at bf16 rate.
    w_qkv = params["w_qkv"].astype(cd)
    wo = params["wo"].astype(cd)
    w1 = params["w1"].astype(cd)
    w2 = params["w2"].astype(cd)

    # LN1 fused into the (concatenated) QKV projection; qkv stored bf16.
    qkv2d = ln_matmul(x2d, params["ln1_g"], params["ln1_b"], w_qkv, params["b_qkv"],
                      relu=False, out_dtype=cd)

    # Head-major (B, heads, S, D) Q/K/V views: attention streams only the columns it
    # needs per step and head slicing happens on the leading (sublane) axis.
    qkv_hm = qkv2d.reshape(B, S, 3, heads, D).transpose(2, 0, 3, 1, 4)   # (3, B, h, S, D)
    q_hm, k_hm, v_hm = qkv_hm[0], qkv_hm[1], qkv_hm[2]

    # Additive attention bias (bf16) = relative-position bias (+ optional padding mask).
    bias = None
    if relposenc:
        bias = relative_position_bias(q_hm, params["pos_emb"], 1.0 / math.sqrt(D))
    if padding_mask is not None:
        pm = jnp.broadcast_to(padding_mask, (B, heads, S, S))
        bias = pm.astype(BIAS_DTYPE) if bias is None else \
            (bias.astype(jnp.float32) + pm).astype(BIAS_DTYPE)

    # Flash-style attention with fused Wo / bo / residual(+x).  (dropout1: identity)
    attn_out = attention(q_hm, k_hm, v_hm, x, bias, wo, params["bo"], heads=heads)

    # FFN: LN2 fused into linear1 (+ReLU, bf16 out); linear2 K-tiled with fused bias+residual.
    a2d = attn_out.reshape(M, H)
    h1 = ln_matmul(a2d, params["ln2_g"], params["ln2_b"], w1, params["b1"],
                   relu=True, out_dtype=cd)
    out2d = matmul_bias_residual(h1, w2, params["b2"], a2d)    # dropout2: identity
    return out2d.reshape(B, S, H)


# ----------------------------- pure-JAX reference (for verification) -----------------------------

def encoder_layer_reference(params, x, padding_mask=None, *, heads, relposenc=True):
    B, S, H = x.shape
    D = H // heads

    def ln(z, g, b):
        mu = jnp.mean(z, -1, keepdims=True)
        var = jnp.mean((z - mu) ** 2, -1, keepdims=True)
        return (z - mu) / jnp.sqrt(var + 1e-5) * g + b

    n1 = ln(x, params["ln1_g"], params["ln1_b"])
    qkv = n1.reshape(B * S, H) @ params["w_qkv"] + params["b_qkv"]
    qkv = qkv.reshape(B, S, 3 * H)
    q, k, v = qkv[..., :H], qkv[..., H:2 * H], qkv[..., 2 * H:]
    qh = q.reshape(B, S, heads, D).transpose(0, 2, 1, 3) / math.sqrt(D)
    kh = k.reshape(B, S, heads, D).transpose(0, 2, 1, 3)
    vh = v.reshape(B, S, heads, D).transpose(0, 2, 1, 3)
    s = jnp.einsum('bhid,bhjd->bhij', qh, kh)
    if relposenc:
        max_rel = (params["pos_emb"].shape[0] - 1) // 2
        pos = jnp.arange(S)
        rel = jnp.clip(pos[None, :] - pos[:, None], -max_rel, max_rel) + max_rel
        remb = params["pos_emb"][rel]                        # (S, S, D)
        s = s + jnp.einsum('bhqd,qkd->bhqk', qh, remb)
    if padding_mask is not None:
        s = s + padding_mask
    p = jax.nn.softmax(s, axis=-1)
    o = jnp.einsum('bhqk,bhkd->bhqd', p, vh)
    o = o.transpose(0, 2, 1, 3).reshape(B, S, H)
    attn = o @ params["wo"] + params["bo"] + x
    n2 = ln(attn, params["ln2_g"], params["ln2_b"])
    ff = jnp.maximum(n2.reshape(B * S, H) @ params["w1"] + params["b1"], 0.0)
    ff = ff @ params["w2"] + params["b2"]
    return ff.reshape(B, S, H) + attn


# ----------------------------- parameter init -----------------------------

def init_params(key, src_seq_len, hidden, heads, linear_hidden_ratio=4):
    D = hidden // heads
    ks = jax.random.split(key, 7)

    def lin(k, fin, fout):
        kw, kb = jax.random.split(k)
        bound = 1.0 / math.sqrt(fin)
        return (jax.random.uniform(kw, (fin, fout), jnp.float32, -bound, bound),
                jax.random.uniform(kb, (1, fout), jnp.float32, -bound, bound))

    wq, bq = lin(ks[0], hidden, hidden)
    wk, bk = lin(ks[1], hidden, hidden)
    wv, bv = lin(ks[2], hidden, hidden)
    params = {
        "w_qkv": jnp.concatenate([wq, wk, wv], axis=1),     # (H, 3H)
        "b_qkv": jnp.concatenate([bq, bk, bv], axis=1),     # (1, 3H)
        "ln1_g": jnp.ones((1, hidden), jnp.float32),
        "ln1_b": jnp.zeros((1, hidden), jnp.float32),
        "ln2_g": jnp.ones((1, hidden), jnp.float32),
        "ln2_b": jnp.zeros((1, hidden), jnp.float32),
    }
    params["wo"], params["bo"] = lin(ks[3], hidden, hidden)
    ffn = linear_hidden_ratio * hidden
    params["w1"], params["b1"] = lin(ks[4], hidden, ffn)
    params["w2"], params["b2"] = lin(ks[5], ffn, hidden)
    num_rel = 2 * (src_seq_len - 1) + 1
    limit = math.sqrt(6.0 / (num_rel + D))                  # xavier_uniform
    params["pos_emb"] = jax.random.uniform(ks[6], (num_rel, D), jnp.float32, -limit, limit)
    return params


# ----------------------------- main -----------------------------

if __name__ == "__main__":
    B = 2
    SEQ = 8
    HIDDEN = 32
    HEADS = 4

    key = jax.random.PRNGKey(0)
    k_param, k_x = jax.random.split(key)

    params = init_params(k_param, SEQ, HIDDEN, HEADS)
    x = jax.random.normal(k_x, (B, SEQ, HIDDEN), jnp.float32)

    fwd = jax.jit(functools.partial(encoder_layer_forward, heads=HEADS, relposenc=True))
    out = fwd(params, x)
    jax.block_until_ready(out)

    ref = encoder_layer_reference(params, x, heads=HEADS, relposenc=True)
    max_err = float(jnp.max(jnp.abs(out - ref)))

    assert out.shape == (B, SEQ, HIDDEN)
    assert bool(jnp.all(jnp.isfinite(out)))
    assert max_err < 5e-2, f"max abs err vs reference: {max_err}"
    print("KERNEL_OK")
</pallas_src>

<mosaic_0001>
module attributes {stable_mosaic.version = 11 : i64} {
  func.func @ln_matmul_kernel(%arg0: i32, %arg1: i32, %arg2: memref<16x32xf32, #tpu.memory_space<vmem>>, %arg3: memref<1x32xf32, #tpu.memory_space<vmem>>, %arg4: memref<1x32xf32, #tpu.memory_space<vmem>>, %arg5: memref<32x96xbf16, #tpu.memory_space<vmem>>, %arg6: memref<1x96xf32, #tpu.memory_space<vmem>>, %arg7: memref<16x96xbf16, #tpu.memory_space<vmem>>, %arg8: memref<16x32xbf16, #tpu.memory_space<vmem>>) attributes {dimension_semantics = [#tpu.dimension_semantics<parallel>, #tpu.dimension_semantics<arbitrary>], iteration_bounds = array<i64: 1, 1>, scalar_prefetch = 0 : i64, scratch_operands = 1 : i64, tpu.core_type = #tpu.core_type<tc>, window_params = [{transform_indices = @transform_0, window_bounds = array<i64: 16, 32>}, {pipeline_mode = #tpu.pipeline_mode<synchronous>, transform_indices = @transform_1, window_bounds = array<i64: 1, 32>}, {pipeline_mode = #tpu.pipeline_mode<synchronous>, transform_indices = @transform_2, window_bounds = array<i64: 1, 32>}, {transform_indices = @transform_3, window_bounds = array<i64: 32, 96>}, {transform_indices = @transform_4, window_bounds = array<i64: 1, 96>}, {transform_indices = @transform_5, window_bounds = array<i64: 16, 96>}]} {
    %c0_i32 = arith.constant 0 : i32
    %0 = arith.cmpi eq, %arg1, %c0_i32 : i32
    %1 = arith.extui %0 : i1 to i32
    %c0_i32_0 = arith.constant 0 : i32
    %2 = arith.cmpi ne, %1, %c0_i32_0 : i32
    scf.if %2 {
      %c0_8 = arith.constant 0 : index
      %c0_9 = arith.constant 0 : index
      %11 = vector.load %arg2[%c0_8, %c0_9] : memref<16x32xf32, #tpu.memory_space<vmem>>, vector<16x32xf32>
      %cst_10 = arith.constant dense<0.000000e+00> : vector<16xf32>
      %12 = vector.multi_reduction <add>, %11, %cst_10 [1] : vector<16x32xf32> to vector<16xf32>
      %13 = vector.shape_cast %12 : vector<16xf32> to vector<16x1xf32>
      %cst_11 = arith.constant 3.200000e+01 : f32
      %14 = vector.broadcast %cst_11 : f32 to vector<16x1xf32>
      %15 = arith.divf %13, %14 : vector<16x1xf32>
      %16 = vector.broadcast %15 : vector<16x1xf32> to vector<16x32xf32>
      %17 = arith.subf %11, %16 : vector<16x32xf32>
      %18 = arith.mulf %17, %17 : vector<16x32xf32>
      %cst_12 = arith.constant dense<0.000000e+00> : vector<16xf32>
      %19 = vector.multi_reduction <add>, %18, %cst_12 [1] : vector<16x32xf32> to vector<16xf32>
      %20 = vector.shape_cast %19 : vector<16xf32> to vector<16x1xf32>
      %cst_13 = arith.constant 3.200000e+01 : f32
      %21 = vector.broadcast %cst_13 : f32 to vector<16x1xf32>
      %22 = arith.divf %20, %21 : vector<16x1xf32>
      %23 = vector.broadcast %15 : vector<16x1xf32> to vector<16x32xf32>
      %24 = arith.subf %11, %23 : vector<16x32xf32>
      %cst_14 = arith.constant 9.99999974E-6 : f32
      %25 = vector.broadcast %cst_14 : f32 to vector<16x1xf32>
      %26 = arith.addf %22, %25 : vector<16x1xf32>
      %27 = math.rsqrt %26 : vector<16x1xf32>
      %28 = vector.broadcast %27 : vector<16x1xf32> to vector<16x32xf32>
      %29 = arith.mulf %24, %28 : vector<16x32xf32>
      %c0_15 = arith.constant 0 : index
      %c0_16 = arith.constant 0 : index
      %30 = vector.load %arg3[%c0_15, %c0_16] : memref<1x32xf32, #tpu.memory_space<vmem>>, vector<1x32xf32>
      %31 = vector.broadcast %30 : vector<1x32xf32> to vector<16x32xf32>
      %32 = arith.mulf %29, %31 : vector<16x32xf32>
      %c0_17 = arith.constant 0 : index
      %c0_18 = arith.constant 0 : index
      %33 = vector.load %arg4[%c0_17, %c0_18] : memref<1x32xf32, #tpu.memory_space<vmem>>, vector<1x32xf32>
      %34 = vector.broadcast %33 : vector<1x32xf32> to vector<16x32xf32>
      %35 = arith.addf %32, %34 : vector<16x32xf32>
      %36 = arith.truncf %35 : vector<16x32xf32> to vector<16x32xbf16>
      %c0_19 = arith.constant 0 : index
      %c0_20 = arith.constant 0 : index
      %37 = vector.load %arg8[%c0_19, %c0_20] : memref<16x32xbf16, #tpu.memory_space<vmem>>, vector<16x32xbf16>
      tpu.vector_store %arg8[%c0_19, %c0_20], %36 {strides = array<i32>} : memref<16x32xbf16, #tpu.memory_space<vmem>>, vector<16x32xbf16>,
    } else {
    }
    %c0 = arith.constant 0 : index
    %c0_1 = arith.constant 0 : index
    %3 = vector.load %arg8[%c0, %c0_1] : memref<16x32xbf16, #tpu.memory_space<vmem>>, vector<16x32xbf16>
    %c0_2 = arith.constant 0 : index
    %c0_3 = arith.constant 0 : index
    %4 = vector.load %arg5[%c0_2, %c0_3] : memref<32x96xbf16, #tpu.memory_space<vmem>>, vector<32x96xbf16>
    %cst = arith.constant dense<0.000000e+00> : vector<16x96xf32>
    %5 = tpu.matmul %3, %4, %cst {dimension_numbers = #tpu.dot_dimension_numbers<[1], [0], [0], [1], [0, 0, 1, 1], [], []>} : vector<16x32xbf16>, vector<32x96xbf16>, vector<16x96xf32> -> vector<16x96xf32>
    %c0_4 = arith.constant 0 : index
    %c0_5 = arith.constant 0 : index
    %6 = vector.load %arg6[%c0_4, %c0_5] : memref<1x96xf32, #tpu.memory_space<vmem>>, vector<1x96xf32>
    %7 = vector.broadcast %6 : vector<1x96xf32> to vector<16x96xf32>
    %8 = arith.addf %5, %7 : vector<16x96xf32>
    %9 = arith.truncf %8 : vector<16x96xf32> to vector<16x96xbf16>
    %c0_6 = arith.constant 0 : index
    %c0_7 = arith.constant 0 : index
    %10 = vector.load %arg7[%c0_6, %c0_7] : memref<16x96xbf16, #tpu.memory_space<vmem>>, vector<16x96xbf16>
    tpu.vector_store %arg7[%c0_6, %c0_7], %9 {strides = array<i32>} : memref<16x96xbf16, #tpu.memory_space<vmem>>, vector<16x96xbf16>,
    return
  }
  func.func @transform_0(%arg0: i32, %arg1: i32) -> (i32, i32) {
    %c0_i32 = arith.constant 0 : i32
    %c0_i32_0 = arith.constant 0 : i32
    return %arg0, %c0_i32 : i32, i32
  }
  func.func @transform_1(%arg0: i32, %arg1: i32) -> (i32, i32) {
    %c0_i32 = arith.constant 0 : i32
    %c0_i32_0 = arith.constant 0 : i32
    %c0_i32_1 = arith.constant 0 : i32
    return %c0_i32, %c0_i32_0 : i32, i32
  }
  func.func @transform_2(%arg0: i32, %arg1: i32) -> (i32, i32) {
    %c0_i32 = arith.constant 0 : i32
    %c0_i32_0 = arith.constant 0 : i32
    %c0_i32_1 = arith.constant 0 : i32
    return %c0_i32, %c0_i32_0 : i32, i32
  }
  func.func @transform_3(%arg0: i32, %arg1: i32) -> (i32, i32) {
    %c0_i32 = arith.constant 0 : i32
    %c0_i32_0 = arith.constant 0 : i32
    return %c0_i32, %arg1 : i32, i32
  }
  func.func @transform_4(%arg0: i32, %arg1: i32) -> (i32, i32) {
    %c0_i32 = arith.constant 0 : i32
    %c0_i32_0 = arith.constant 0 : i32
    return %c0_i32, %arg1 : i32, i32
  }
  func.func @transform_5(%arg0: i32, %arg1: i32) -> (i32, i32) {
    %c0_i32 = arith.constant 0 : i32
    return %arg0, %arg1 : i32, i32
  }
}

module attributes {stable_mosaic.version = 11 : i64} {
  func.func @attn_kernel(%arg0: i32, %arg1: i32, %arg2: i32, %arg3: memref<1x4x8x8xbf16, #tpu.memory_space<vmem>>, %arg4: memref<1x4x8x8xbf16, #tpu.memory_space<vmem>>, %arg5: memref<1x4x8x8xbf16, #tpu.memory_space<vmem>>, %arg6: memref<1x4x8x8xbf16, #tpu.memory_space<vmem>>, %arg7: memref<32x32xbf16, #tpu.memory_space<vmem>>, %arg8: memref<1x32xf32, #tpu.memory_space<vmem>>, %arg9: memref<1x8x32xf32, #tpu.memory_space<vmem>>, %arg10: memref<1x8x32xf32, #tpu.memory_space<vmem>>, %arg11: memref<4x8x1xf32, #tpu.memory_space<vmem>>, %arg12: memref<4x8x1xf32, #tpu.memory_space<vmem>>, %arg13: memref<4x8x8xf32, #tpu.memory_space<vmem>>) attributes {dimension_semantics = [#tpu.dimension_semantics<parallel>, #tpu.dimension_semantics<parallel>, #tpu.dimension_semantics<arbitrary>], iteration_bounds = array<i64: 2, 1, 1>, scalar_prefetch = 0 : i64, scratch_operands = 3 : i64, tpu.core_type = #tpu.core_type<tc>, window_params = [{transform_indices = @transform_0, window_bounds = array<i64: 1, 4, 8, 8>}, {transform_indices = @transform_1, window_bounds = array<i64: 1, 4, 8, 8>}, {transform_indices = @transform_2, window_bounds = array<i64: 1, 4, 8, 8>}, {transform_indices = @transform_3, window_bounds = array<i64: 1, 4, 8, 8>}, {pipeline_mode = #tpu.pipeline_mode<synchronous>, transform_indices = @transform_4, window_bounds = array<i64: 32, 32>}, {pipeline_mode = #tpu.pipeline_mode<synchronous>, transform_indices = @transform_5, window_bounds = array<i64: 1, 32>}, {transform_indices = @transform_6, window_bounds = array<i64: 1, 8, 32>}, {transform_indices = @transform_7, window_bounds = array<i64: 1, 8, 32>}]} {
    %c0_i32 = arith.constant 0 : i32
    %0 = arith.cmpi eq, %arg2, %c0_i32 : i32
    %1 = arith.extui %0 : i1 to i32
    %c0_i32_0 = arith.constant 0 : i32
    %2 = arith.cmpi ne, %1, %c0_i32_0 : i32
    scf.if %2 {
      %cst_118 = arith.constant -1.000000e+30 : f32
      %192 = vector.broadcast %cst_118 : f32 to vector<4x8x1xf32>
      %c0_119 = arith.constant 0 : index
      %c0_120 = arith.constant 0 : index
      %c0_121 = arith.constant 0 : index
      %193 = vector.load %arg11[%c0_119, %c0_120, %c0_121] : memref<4x8x1xf32, #tpu.memory_space<vmem>>, vector<4x8x1xf32>
      tpu.vector_store %arg11[%c0_119, %c0_120, %c0_121], %192 {strides = array<i32>} : memref<4x8x1xf32, #tpu.memory_space<vmem>>, vector<4x8x1xf32>,
      %cst_122 = arith.constant 0.000000e+00 : f32
      %194 = vector.broadcast %cst_122 : f32 to vector<4x8x1xf32>
      %c0_123 = arith.constant 0 : index
      %c0_124 = arith.constant 0 : index
      %c0_125 = arith.constant 0 : index
      %195 = vector.load %arg12[%c0_123, %c0_124, %c0_125] : memref<4x8x1xf32, #tpu.memory_space<vmem>>, vector<4x8x1xf32>
      tpu.vector_store %arg12[%c0_123, %c0_124, %c0_125], %194 {strides = array<i32>} : memref<4x8x1xf32, #tpu.memory_space<vmem>>, vector<4x8x1xf32>,
      %cst_126 = arith.constant 0.000000e+00 : f32
      %196 = vector.broadcast %cst_126 : f32 to vector<4x8x8xf32>
      %c0_127 = arith.constant 0 : index
      %c0_128 = arith.constant 0 : index
      %c0_129 = arith.constant 0 : index
      %197 = vector.load %arg13[%c0_127, %c0_128, %c0_129] : memref<4x8x8xf32, #tpu.memory_space<vmem>>, vector<4x8x8xf32>
      tpu.vector_store %arg13[%c0_127, %c0_128, %c0_129], %196 {strides = array<i32>} : memref<4x8x8xf32, #tpu.memory_space<vmem>>, vector<4x8x8xf32>,
    } else {
    }
    %c0 = arith.constant 0 : index
    %c0_1 = arith.constant 0 : index
    %c0_2 = arith.constant 0 : index
    %c0_3 = arith.constant 0 : index
    %3 = vector.load %arg3[%c0, %c0_1, %c0_2, %c0_3] : memref<1x4x8x8xbf16, #tpu.memory_space<vmem>>, vector<1x4x8x8xbf16>
    %4 = vector.shape_cast %3 : vector<1x4x8x8xbf16> to vector<4x8x8xbf16>
    %c0_4 = arith.constant 0 : index
    %c0_5 = arith.constant 0 : index
    %c0_6 = arith.constant 0 : index
    %c0_7 = arith.constant 0 : index
    %5 = vector.load %arg4[%c0_4, %c0_5, %c0_6, %c0_7] : memref<1x4x8x8xbf16, #tpu.memory_space<vmem>>, vector<1x4x8x8xbf16>
    %6 = vector.shape_cast %5 : vector<1x4x8x8xbf16> to vector<4x8x8xbf16>
    %c0_8 = arith.constant 0 : index
    %c0_9 = arith.constant 0 : index
    %c0_10 = arith.constant 0 : index
    %c0_11 = arith.constant 0 : index
    %7 = vector.load %arg5[%c0_8, %c0_9, %c0_10, %c0_11] : memref<1x4x8x8xbf16, #tpu.memory_space<vmem>>, vector<1x4x8x8xbf16>
    %8 = vector.shape_cast %7 : vector<1x4x8x8xbf16> to vector<4x8x8xbf16>
    %9 = vector.extract_strided_slice %4 {offsets = [0, 0, 0], sizes = [1, 8, 8], strides = [1, 1, 1]} : vector<4x8x8xbf16> to vector<1x8x8xbf16>
    %10 = vector.shape_cast %9 : vector<1x8x8xbf16> to vector<8x8xbf16>
    %11 = vector.extract_strided_slice %6 {offsets = [0, 0, 0], sizes = [1, 8, 8], strides = [1, 1, 1]} : vector<4x8x8xbf16> to vector<1x8x8xbf16>
    %12 = vector.shape_cast %11 : vector<1x8x8xbf16> to vector<8x8xbf16>
    "tpu.trace_start"() <{level = 10 : i32, message = "qd,kd->qk"}> : () -> ()
    %cst = arith.constant dense<0.000000e+00> : vector<8x8xf32>
    %13 = tpu.matmul %10, %12, %cst {dimension_numbers = #tpu.dot_dimension_numbers<[1], [1], [0], [0], [0, 0, 1, 0], [], []>} : vector<8x8xbf16>, vector<8x8xbf16>, vector<8x8xf32> -> vector<8x8xf32>
    "tpu.trace_stop"() : () -> ()
    %cst_12 = arith.constant 0.353553385 : f32
    %14 = vector.broadcast %cst_12 : f32 to vector<8x8xf32>
    %15 = arith.mulf %13, %14 : vector<8x8xf32>
    %c0_13 = arith.constant 0 : index
    %c0_14 = arith.constant 0 : index
    %c0_15 = arith.constant 0 : index
    %c0_16 = arith.constant 0 : index
    %16 = vector.load %arg6[%c0_13, %c0_14, %c0_15, %c0_16] : memref<1x4x8x8xbf16, #tpu.memory_space<vmem>>, vector<1x1x8x8xbf16>
    %17 = vector.shape_cast %16 : vector<1x1x8x8xbf16> to vector<8x8xbf16>
    %18 = arith.extf %17 : vector<8x8xbf16> to vector<8x8xf32>
    %19 = arith.addf %15, %18 : vector<8x8xf32>
    %c0_17 = arith.constant 0 : index
    %c0_18 = arith.constant 0 : index
    %c0_19 = arith.constant 0 : index
    %20 = vector.load %arg11[%c0_17, %c0_18, %c0_19] : memref<4x8x1xf32, #tpu.memory_space<vmem>>, vector<1x8x1xf32>
    %21 = vector.shape_cast %20 : vector<1x8x1xf32> to vector<8x1xf32>
    %cst_20 = arith.constant dense<0xFF800000> : vector<8xf32>
    %22 = vector.multi_reduction <maximumf>, %19, %cst_20 [1] : vector<8x8xf32> to vector<8xf32>
    %23 = vector.shape_cast %22 : vector<8xf32> to vector<8x1xf32>
    %24 = arith.maximumf %21, %23 : vector<8x1xf32>
    %25 = arith.subf %21, %24 : vector<8x1xf32>
    %26 = math.exp %25 : vector<8x1xf32>
    %27 = vector.broadcast %24 : vector<8x1xf32> to vector<8x8xf32>
    %28 = arith.subf %19, %27 : vector<8x8xf32>
    %29 = math.exp %28 : vector<8x8xf32>
    %c0_21 = arith.constant 0 : index
    %c0_22 = arith.constant 0 : index
    %c0_23 = arith.constant 0 : index
    %30 = vector.load %arg12[%c0_21, %c0_22, %c0_23] : memref<4x8x1xf32, #tpu.memory_space<vmem>>, vector<1x8x1xf32>
    %31 = vector.shape_cast %30 : vector<1x8x1xf32> to vector<8x1xf32>
    %32 = arith.mulf %26, %31 : vector<8x1xf32>
    %cst_24 = arith.constant dense<0.000000e+00> : vector<8xf32>
    %33 = vector.multi_reduction <add>, %29, %cst_24 [1] : vector<8x8xf32> to vector<8xf32>
    %34 = vector.shape_cast %33 : vector<8xf32> to vector<8x1xf32>
    %35 = arith.addf %32, %34 : vector<8x1xf32>
    %c0_25 = arith.constant 0 : index
    %c0_26 = arith.constant 0 : index
    %c0_27 = arith.constant 0 : index
    %36 = vector.load %arg12[%c0_25, %c0_26, %c0_27] : memref<4x8x1xf32, #tpu.memory_space<vmem>>, vector<1x8x1xf32>
    %37 = vector.shape_cast %36 : vector<1x8x1xf32> to vector<8x1xf32>
    %38 = vector.shape_cast %35 : vector<8x1xf32> to vector<1x8x1xf32>
    tpu.vector_store %arg12[%c0_25, %c0_26, %c0_27], %38 {strides = array<i32>} : memref<4x8x1xf32, #tpu.memory_space<vmem>>, vector<1x8x1xf32>,
    %c0_28 = arith.constant 0 : index
    %c0_29 = arith.constant 0 : index
    %c0_30 = arith.constant 0 : index
    %39 = vector.load %arg13[%c0_28, %c0_29, %c0_30] : memref<4x8x8xf32, #tpu.memory_space<vmem>>, vector<1x8x8xf32>
    %40 = vector.shape_cast %39 : vector<1x8x8xf32> to vector<8x8xf32>
    %41 = vector.broadcast %26 : vector<8x1xf32> to vector<8x8xf32>
    %42 = arith.mulf %41, %40 : vector<8x8xf32>
    %43 = arith.truncf %29 : vector<8x8xf32> to vector<8x8xbf16>
    %44 = vector.extract_strided_slice %8 {offsets = [0, 0, 0], sizes = [1, 8, 8], strides = [1, 1, 1]} : vector<4x8x8xbf16> to vector<1x8x8xbf16>
    %45 = vector.shape_cast %44 : vector<1x8x8xbf16> to vector<8x8xbf16>
    %cst_31 = arith.constant dense<0.000000e+00> : vector<8x8xf32>
    %46 = tpu.matmul %43, %45, %cst_31 {dimension_numbers = #tpu.dot_dimension_numbers<[1], [0], [0], [1], [0, 0, 1, 1], [], []>} : vector<8x8xbf16>, vector<8x8xbf16>, vector<8x8xf32> -> vector<8x8xf32>
    %47 = arith.addf %42, %46 : vector<8x8xf32>
    %c0_32 = arith.constant 0 : index
    %c0_33 = arith.constant 0 : index
    %c0_34 = arith.constant 0 : index
    %48 = vector.load %arg13[%c0_32, %c0_33, %c0_34] : memref<4x8x8xf32, #tpu.memory_space<vmem>>, vector<1x8x8xf32>
    %49 = vector.shape_cast %48 : vector<1x8x8xf32> to vector<8x8xf32>
    %50 = vector.shape_cast %47 : vector<8x8xf32> to vector<1x8x8xf32>
    tpu.vector_store %arg13[%c0_32, %c0_33, %c0_34], %50 {strides = array<i32>} : memref<4x8x8xf32, #tpu.memory_space<vmem>>, vector<1x8x8xf32>,
    %c0_35 = arith.constant 0 : index
    %c0_36 = arith.constant 0 : index
    %c0_37 = arith.constant 0 : index
    %51 = vector.load %arg11[%c0_35, %c0_36, %c0_37] : memref<4x8x1xf32, #tpu.memory_space<vmem>>, vector<1x8x1xf32>
    %52 = vector.shape_cast %51 : vector<1x8x1xf32> to vector<8x1xf32>
    %53 = vector.shape_cast %24 : vector<8x1xf32> to vector<1x8x1xf32>
    tpu.vector_store %arg11[%c0_35, %c0_36, %c0_37], %53 {strides = array<i32>} : memref<4x8x1xf32, #tpu.memory_space<vmem>>, vector<1x8x1xf32>,
    %54 = vector.extract_strided_slice %4 {offsets = [1, 0, 0], sizes = [1, 8, 8], strides = [1, 1, 1]} : vector<4x8x8xbf16> to vector<1x8x8xbf16>
    %55 = vector.shape_cast %54 : vector<1x8x8xbf16> to vector<8x8xbf16>
    %56 = vector.extract_strided_slice %6 {offsets = [1, 0, 0], sizes = [1, 8, 8], strides = [1, 1, 1]} : vector<4x8x8xbf16> to vector<1x8x8xbf16>
    %57 = vector.shape_cast %56 : vector<1x8x8xbf16> to vector<8x8xbf16>
    "tpu.trace_start"() <{level = 10 : i32, message = "qd,kd->qk"}> : () -> ()
    %cst_38 = arith.constant dense<0.000000e+00> : vector<8x8xf32>
    %58 = tpu.matmul %55, %57, %cst_38 {dimension_numbers = #tpu.dot_dimension_numbers<[1], [1], [0], [0], [0, 0, 1, 0], [], []>} : vector<8x8xbf16>, vector<8x8xbf16>, vector<8x8xf32> -> vector<8x8xf32>
    "tpu.trace_stop"() : () -> ()
    %cst_39 = arith.constant 0.353553385 : f32
    %59 = vector.broadcast %cst_39 : f32 to vector<8x8xf32>
    %60 = arith.mulf %58, %59 : vector<8x8xf32>
    %c0_40 = arith.constant 0 : index
    %c1 = arith.constant 1 : index
    %c0_41 = arith.constant 0 : index
    %c0_42 = arith.constant 0 : index
    %61 = vector.load %arg6[%c0_40, %c1, %c0_41, %c0_42] : memref<1x4x8x8xbf16, #tpu.memory_space<vmem>>, vector<1x1x8x8xbf16>
    %62 = vector.shape_cast %61 : vector<1x1x8x8xbf16> to vector<8x8xbf16>
    %63 = arith.extf %62 : vector<8x8xbf16> to vector<8x8xf32>
    %64 = arith.addf %60, %63 : vector<8x8xf32>
    %c1_43 = arith.constant 1 : index
    %c0_44 = arith.constant 0 : index
    %c0_45 = arith.constant 0 : index
    %65 = vector.load %arg11[%c1_43, %c0_44, %c0_45] : memref<4x8x1xf32, #tpu.memory_space<vmem>>, vector<1x8x1xf32>
    %66 = vector.shape_cast %65 : vector<1x8x1xf32> to vector<8x1xf32>
    %cst_46 = arith.constant dense<0xFF800000> : vector<8xf32>
    %67 = vector.multi_reduction <maximumf>, %64, %cst_46 [1] : vector<8x8xf32> to vector<8xf32>
    %68 = vector.shape_cast %67 : vector<8xf32> to vector<8x1xf32>
    %69 = arith.maximumf %66, %68 : vector<8x1xf32>
    %70 = arith.subf %66, %69 : vector<8x1xf32>
    %71 = math.exp %70 : vector<8x1xf32>
    %72 = vector.broadcast %69 : vector<8x1xf32> to vector<8x8xf32>
    %73 = arith.subf %64, %72 : vector<8x8xf32>
    %74 = math.exp %73 : vector<8x8xf32>
    %c1_47 = arith.constant 1 : index
    %c0_48 = arith.constant 0 : index
    %c0_49 = arith.constant 0 : index
    %75 = vector.load %arg12[%c1_47, %c0_48, %c0_49] : memref<4x8x1xf32, #tpu.memory_space<vmem>>, vector<1x8x1xf32>
    %76 = vector.shape_cast %75 : vector<1x8x1xf32> to vector<8x1xf32>
    %77 = arith.mulf %71, %76 : vector<8x1xf32>
    %cst_50 = arith.constant dense<0.000000e+00> : vector<8xf32>
    %78 = vector.multi_reduction <add>, %74, %cst_50 [1] : vector<8x8xf32> to vector<8xf32>
    %79 = vector.shape_cast %78 : vector<8xf32> to vector<8x1xf32>
    %80 = arith.addf %77, %79 : vector<8x1xf32>
    %c1_51 = arith.constant 1 : index
    %c0_52 = arith.constant 0 : index
    %c0_53 = arith.constant 0 : index
    %81 = vector.load %arg12[%c1_51, %c0_52, %c0_53] : memref<4x8x1xf32, #tpu.memory_space<vmem>>, vector<1x8x1xf32>
    %82 = vector.shape_cast %81 : vector<1x8x1xf32> to vector<8x1xf32>
    %83 = vector.shape_cast %80 : vector<8x1xf32> to vector<1x8x1xf32>
    tpu.vector_store %arg12[%c1_51, %c0_52, %c0_53], %83 {strides = array<i32>} : memref<4x8x1xf32, #tpu.memory_space<vmem>>, vector<1x8x1xf32>,
    %c1_54 = arith.constant 1 : index
    %c0_55 = arith.constant 0 : index
    %c0_56 = arith.constant 0 : index
    %84 = vector.load %arg13[%c1_54, %c0_55, %c0_56] : memref<4x8x8xf32, #tpu.memory_space<vmem>>, vector<1x8x8xf32>
    %85 = vector.shape_cast %84 : vector<1x8x8xf32> to vector<8x8xf32>
    %86 = vector.broadcast %71 : vector<8x1xf32> to vector<8x8xf32>
    %87 = arith.mulf %86, %85 : vector<8x8xf32>
    %88 = arith.truncf %74 : vector<8x8xf32> to vector<8x8xbf16>
    %89 = vector.extract_strided_slice %8 {offsets = [1, 0, 0], sizes = [1, 8, 8], strides = [1, 1, 1]} : vector<4x8x8xbf16> to vector<1x8x8xbf16>
    %90 = vector.shape_cast %89 : vector<1x8x8xbf16> to vector<8x8xbf16>
    %cst_57 = arith.constant dense<0.000000e+00> : vector<8x8xf32>
    %91 = tpu.matmul %88, %90, %cst_57 {dimension_numbers = #tpu.dot_dimension_numbers<[1], [0], [0], [1], [0, 0, 1, 1], [], []>} : vector<8x8xbf16>, vector<8x8xbf16>, vector<8x8xf32> -> vector<8x8xf32>
    %92 = arith.addf %87, %91 : vector<8x8xf32>
    %c1_58 = arith.constant 1 : index
    %c0_59 = arith.constant 0 : index
    %c0_60 = arith.constant 0 : index
    %93 = vector.load %arg13[%c1_58, %c0_59, %c0_60] : memref<4x8x8xf32, #tpu.memory_space<vmem>>, vector<1x8x8xf32>
    %94 = vector.shape_cast %93 : vector<1x8x8xf32> to vector<8x8xf32>
    %95 = vector.shape_cast %92 : vector<8x8xf32> to vector<1x8x8xf32>
    tpu.vector_store %arg13[%c1_58, %c0_59, %c0_60], %95 {strides = array<i32>} : memref<4x8x8xf32, #tpu.memory_space<vmem>>, vector<1x8x8xf32>,
    %c1_61 = arith.constant 1 : index
    %c0_62 = arith.constant 0 : index
    %c0_63 = arith.constant 0 : index
    %96 = vector.load %arg11[%c1_61, %c0_62, %c0_63] : memref<4x8x1xf32, #tpu.memory_space<vmem>>, vector<1x8x1xf32>
    %97 = vector.shape_cast %96 : vector<1x8x1xf32> to vector<8x1xf32>
    %98 = vector.shape_cast %69 : vector<8x1xf32> to vector<1x8x1xf32>
    tpu.vector_store %arg11[%c1_61, %c0_62, %c0_63], %98 {strides = array<i32>} : memref<4x8x1xf32, #tpu.memory_space<vmem>>, vector<1x8x1xf32>,
    %99 = vector.extract_strided_slice %4 {offsets = [2, 0, 0], sizes = [1, 8, 8], strides = [1, 1, 1]} : vector<4x8x8xbf16> to vector<1x8x8xbf16>
    %100 = vector.shape_cast %99 : vector<1x8x8xbf16> to vector<8x8xbf16>
    %101 = vector.extract_strided_slice %6 {offsets = [2, 0, 0], sizes = [1, 8, 8], strides = [1, 1, 1]} : vector<4x8x8xbf16> to vector<1x8x8xbf16>
    %102 = vector.shape_cast %101 : vector<1x8x8xbf16> to vector<8x8xbf16>
    "tpu.trace_start"() <{level = 10 : i32, message = "qd,kd->qk"}> : () -> ()
    %cst_64 = arith.constant dense<0.000000e+00> : vector<8x8xf32>
    %103 = tpu.matmul %100, %102, %cst_64 {dimension_numbers = #tpu.dot_dimension_numbers<[1], [1], [0], [0], [0, 0, 1, 0], [], []>} : vector<8x8xbf16>, vector<8x8xbf16>, vector<8x8xf32> -> vector<8x8xf32>
    "tpu.trace_stop"() : () -> ()
    %cst_65 = arith.constant 0.353553385 : f32
    %104 = vector.broadcast %cst_65 : f32 to vector<8x8xf32>
    %105 = arith.mulf %103, %104 : vector<8x8xf32>
    %c0_66 = arith.constant 0 : index
    %c2 = arith.constant 2 : index
    %c0_67 = arith.constant 0 : index
    %c0_68 = arith.constant 0 : index
    %106 = vector.load %arg6[%c0_66, %c2, %c0_67, %c0_68] : memref<1x4x8x8xbf16, #tpu.memory_space<vmem>>, vector<1x1x8x8xbf16>
    %107 = vector.shape_cast %106 : vector<1x1x8x8xbf16> to vector<8x8xbf16>
    %108 = arith.extf %107 : vector<8x8xbf16> to vector<8x8xf32>
    %109 = arith.addf %105, %108 : vector<8x8xf32>
    %c2_69 = arith.constant 2 : index
    %c0_70 = arith.constant 0 : index
    %c0_71 = arith.constant 0 : index
    %110 = vector.load %arg11[%c2_69, %c0_70, %c0_71] : memref<4x8x1xf32, #tpu.memory_space<vmem>>, vector<1x8x1xf32>
    %111 = vector.shape_cast %110 : vector<1x8x1xf32> to vector<8x1xf32>
    %cst_72 = arith.constant dense<0xFF800000> : vector<8xf32>
    %112 = vector.multi_reduction <maximumf>, %109, %cst_72 [1] : vector<8x8xf32> to vector<8xf32>
    %113 = vector.shape_cast %112 : vector<8xf32> to vector<8x1xf32>
    %114 = arith.maximumf %111, %113 : vector<8x1xf32>
    %115 = arith.subf %111, %114 : vector<8x1xf32>
    %116 = math.exp %115 : vector<8x1xf32>
    %117 = vector.broadcast %114 : vector<8x1xf32> to vector<8x8xf32>
    %118 = arith.subf %109, %117 : vector<8x8xf32>
    %119 = math.exp %118 : vector<8x8xf32>
    %c2_73 = arith.constant 2 : index
    %c0_74 = arith.constant 0 : index
    %c0_75 = arith.constant 0 : index
    %120 = vector.load %arg12[%c2_73, %c0_74, %c0_75] : memref<4x8x1xf32, #tpu.memory_space<vmem>>, vector<1x8x1xf32>
    %121 = vector.shape_cast %120 : vector<1x8x1xf32> to vector<8x1xf32>
    %122 = arith.mulf %116, %121 : vector<8x1xf32>
    %cst_76 = arith.constant dense<0.000000e+00> : vector<8xf32>
    %123 = vector.multi_reduction <add>, %119, %cst_76 [1] : vector<8x8xf32> to vector<8xf32>
    %124 = vector.shape_cast %123 : vector<8xf32> to vector<8x1xf32>
    %125 = arith.addf %122, %124 : vector<8x1xf32>
    %c2_77 = arith.constant 2 : index
    %c0_78 = arith.constant 0 : index
    %c0_79 = arith.constant 0 : index
    %126 = vector.load %arg12[%c2_77, %c0_78, %c0_79] : memref<4x8x1xf32, #tpu.memory_space<vmem>>, vector<1x8x1xf32>
    %127 = vector.shape_cast %126 : vector<1x8x1xf32> to vector<8x1xf32>
    %128 = vector.shape_cast %125 : vector<8x1xf32> to vector<1x8x1xf32>
    tpu.vector_store %arg12[%c2_77, %c0_78, %c0_79], %128 {strides = array<i32>} : memref<4x8x1xf32, #tpu.memory_space<vmem>>, vector<1x8x1xf32>,
    %c2_80 = arith.constant 2 : index
    %c0_81 = arith.constant 0 : index
    %c0_82 = arith.constant 0 : index
    %129 = vector.load %arg13[%c2_80, %c0_81, %c0_82] : memref<4x8x8xf32, #tpu.memory_space<vmem>>, vector<1x8x8xf32>
    %130 = vector.shape_cast %129 : vector<1x8x8xf32> to vector<8x8xf32>
    %131 = vector.broadcast %116 : vector<8x1xf32> to vector<8x8xf32>
    %132 = arith.mulf %131, %130 : vector<8x8xf32>
    %133 = arith.truncf %119 : vector<8x8xf32> to vector<8x8xbf16>
    %134 = vector.extract_strided_slice %8 {offsets = [2, 0, 0], sizes = [1, 8, 8], strides = [1, 1, 1]} : vector<4x8x8xbf16> to vector<1x8x8xbf16>
    %135 = vector.shape_cast %134 : vector<1x8x8xbf16> to vector<8x8xbf16>
    %cst_83 = arith.constant dense<0.000000e+00> : vector<8x8xf32>
    %136 = tpu.matmul %133, %135, %cst_83 {dimension_numbers = #tpu.dot_dimension_numbers<[1], [0], [0], [1], [0, 0, 1, 1], [], []>} : vector<8x8xbf16>, vector<8x8xbf16>, vector<8x8xf32> -> vector<8x8xf32>
    %137 = arith.addf %132, %136 : vector<8x8xf32>
    %c2_84 = arith.constant 2 : index
    %c0_85 = arith.constant 0 : index
    %c0_86 = arith.constant 0 : index
    %138 = vector.load %arg13[%c2_84, %c0_85, %c0_86] : memref<4x8x8xf32, #tpu.memory_space<vmem>>, vector<1x8x8xf32>
    %139 = vector.shape_cast %138 : vector<1x8x8xf32> to vector<8x8xf32>
    %140 = vector.shape_cast %137 : vector<8x8xf32> to vector<1x8x8xf32>
    tpu.vector_store %arg13[%c2_84, %c0_85, %c0_86], %140 {strides = array<i32>} : memref<4x8x8xf32, #tpu.memory_space<vmem>>, vector<1x8x8xf32>,
    %c2_87 = arith.constant 2 : index
    %c0_88 = arith.constant 0 : index
    %c0_89 = arith.constant 0 : index
    %141 = vector.load %arg11[%c2_87, %c0_88, %c0_89] : memref<4x8x1xf32, #tpu.memory_space<vmem>>, vector<1x8x1xf32>
    %142 = vector.shape_cast %141 : vector<1x8x1xf32> to vector<8x1xf32>
    %143 = vector.shape_cast %114 : vector<8x1xf32> to vector<1x8x1xf32>
    tpu.vector_store %arg11[%c2_87, %c0_88, %c0_89], %143 {strides = array<i32>} : memref<4x8x1xf32, #tpu.memory_space<vmem>>, vector<1x8x1xf32>,
    %144 = vector.extract_strided_slice %4 {offsets = [3, 0, 0], sizes = [1, 8, 8], strides = [1, 1, 1]} : vector<4x8x8xbf16> to vector<1x8x8xbf16>
    %145 = vector.shape_cast %144 : vector<1x8x8xbf16> to vector<8x8xbf16>
    %146 = vector.extract_strided_slice %6 {offsets = [3, 0, 0], sizes = [1, 8, 8], strides = [1, 1, 1]} : vector<4x8x8xbf16> to vector<1x8x8xbf16>
    %147 = vector.shape_cast %146 : vector<1x8x8xbf16> to vector<8x8xbf16>
    "tpu.trace_start"() <{level = 10 : i32, message = "qd,kd->qk"}> : () -> ()
    %cst_90 = arith.constant dense<0.000000e+00> : vector<8x8xf32>
    %148 = tpu.matmul %145, %147, %cst_90 {dimension_numbers = #tpu.dot_dimension_numbers<[1], [1], [0], [0], [0, 0, 1, 0], [], []>} : vector<8x8xbf16>, vector<8x8xbf16>, vector<8x8xf32> -> vector<8x8xf32>
    "tpu.trace_stop"() : () -> ()
    %cst_91 = arith.constant 0.353553385 : f32
    %149 = vector.broadcast %cst_91 : f32 to vector<8x8xf32>
    %150 = arith.mulf %148, %149 : vector<8x8xf32>
    %c0_92 = arith.constant 0 : index
    %c3 = arith.constant 3 : index
    %c0_93 = arith.constant 0 : index
    %c0_94 = arith.constant 0 : index
    %151 = vector.load %arg6[%c0_92, %c3, %c0_93, %c0_94] : memref<1x4x8x8xbf16, #tpu.memory_space<vmem>>, vector<1x1x8x8xbf16>
    %152 = vector.shape_cast %151 : vector<1x1x8x8xbf16> to vector<8x8xbf16>
    %153 = arith.extf %152 : vector<8x8xbf16> to vector<8x8xf32>
    %154 = arith.addf %150, %153 : vector<8x8xf32>
    %c3_95 = arith.constant 3 : index
    %c0_96 = arith.constant 0 : index
    %c0_97 = arith.constant 0 : index
    %155 = vector.load %arg11[%c3_95, %c0_96, %c0_97] : memref<4x8x1xf32, #tpu.memory_space<vmem>>, vector<1x8x1xf32>
    %156 = vector.shape_cast %155 : vector<1x8x1xf32> to vector<8x1xf32>
    %cst_98 = arith.constant dense<0xFF800000> : vector<8xf32>
    %157 = vector.multi_reduction <maximumf>, %154, %cst_98 [1] : vector<8x8xf32> to vector<8xf32>
    %158 = vector.shape_cast %157 : vector<8xf32> to vector<8x1xf32>
    %159 = arith.maximumf %156, %158 : vector<8x1xf32>
    %160 = arith.subf %156, %159 : vector<8x1xf32>
    %161 = math.exp %160 : vector<8x1xf32>
    %162 = vector.broadcast %159 : vector<8x1xf32> to vector<8x8xf32>
    %163 = arith.subf %154, %162 : vector<8x8xf32>
    %164 = math.exp %163 : vector<8x8xf32>
    %c3_99 = arith.constant 3 : index
    %c0_100 = arith.constant 0 : index
    %c0_101 = arith.constant 0 : index
    %165 = vector.load %arg12[%c3_99, %c0_100, %c0_101] : memref<4x8x1xf32, #tpu.memory_space<vmem>>, vector<1x8x1xf32>
    %166 = vector.shape_cast %165 : vector<1x8x1xf32> to vector<8x1xf32>
    %167 = arith.mulf %161, %166 : vector<8x1xf32>
    %cst_102 = arith.constant dense<0.000000e+00> : vector<8xf32>
    %168 = vector.multi_reduction <add>, %164, %cst_102 [1] : vector<8x8xf32> to vector<8xf32>
    %169 = vector.shape_cast %168 : vector<8xf32> to vector<8x1xf32>
    %170 = arith.addf %167, %169 : vector<8x1xf32>
    %c3_103 = arith.constant 3 : index
    %c0_104 = arith.constant 0 : index
    %c0_105 = arith.constant 0 : index
    %171 = vector.load %arg12[%c3_103, %c0_104, %c0_105] : memref<4x8x1xf32, #tpu.memory_space<vmem>>, vector<1x8x1xf32>
    %172 = vector.shape_cast %171 : vector<1x8x1xf32> to vector<8x1xf32>
    %173 = vector.shape_cast %170 : vector<8x1xf32> to vector<1x8x1xf32>
    tpu.vector_store %arg12[%c3_103, %c0_104, %c0_105], %173 {strides = array<i32>} : memref<4x8x1xf32, #tpu.memory_space<vmem>>, vector<1x8x1xf32>,
    %c3_106 = arith.constant 3 : index
    %c0_107 = arith.constant 0 : index
    %c0_108 = arith.constant 0 : index
    %174 = vector.load %arg13[%c3_106, %c0_107, %c0_108] : memref<4x8x8xf32, #tpu.memory_space<vmem>>, vector<1x8x8xf32>
    %175 = vector.shape_cast %174 : vector<1x8x8xf32> to vector<8x8xf32>
    %176 = vector.broadcast %161 : vector<8x1xf32> to vector<8x8xf32>
    %177 = arith.mulf %176, %175 : vector<8x8xf32>
    %178 = arith.truncf %164 : vector<8x8xf32> to vector<8x8xbf16>
    %179 = vector.extract_strided_slice %8 {offsets = [3, 0, 0], sizes = [1, 8, 8], strides = [1, 1, 1]} : vector<4x8x8xbf16> to vector<1x8x8xbf16>
    %180 = vector.shape_cast %179 : vector<1x8x8xbf16> to vector<8x8xbf16>
    %cst_109 = arith.constant dense<0.000000e+00> : vector<8x8xf32>
    %181 = tpu.matmul %178, %180, %cst_109 {dimension_numbers = #tpu.dot_dimension_numbers<[1], [0], [0], [1], [0, 0, 1, 1], [], []>} : vector<8x8xbf16>, vector<8x8xbf16>, vector<8x8xf32> -> vector<8x8xf32>
    %182 = arith.addf %177, %181 : vector<8x8xf32>
    %c3_110 = arith.constant 3 : index
    %c0_111 = arith.constant 0 : index
    %c0_112 = arith.constant 0 : index
    %183 = vector.load %arg13[%c3_110, %c0_111, %c0_112] : memref<4x8x8xf32, #tpu.memory_space<vmem>>, vector<1x8x8xf32>
    %184 = vector.shape_cast %183 : vector<1x8x8xf32> to vector<8x8xf32>
    %185 = vector.shape_cast %182 : vector<8x8xf32> to vector<1x8x8xf32>
    tpu.vector_store %arg13[%c3_110, %c0_111, %c0_112], %185 {strides = array<i32>} : memref<4x8x8xf32, #tpu.memory_space<vmem>>, vector<1x8x8xf32>,
    %c3_113 = arith.constant 3 : index
    %c0_114 = arith.constant 0 : index
    %c0_115 = arith.constant 0 : index
    %186 = vector.load %arg11[%c3_113, %c0_114, %c0_115] : memref<4x8x1xf32, #tpu.memory_space<vmem>>, vector<1x8x1xf32>
    %187 = vector.shape_cast %186 : vector<1x8x1xf32> to vector<8x1xf32>
    %188 = vector.shape_cast %159 : vector<8x1xf32> to vector<1x8x1xf32>
    tpu.vector_store %arg11[%c3_113, %c0_114, %c0_115], %188 {strides = array<i32>} : memref<4x8x1xf32, #tpu.memory_space<vmem>>, vector<1x8x1xf32>,
    %c0_i32_116 = arith.constant 0 : i32
    %189 = arith.cmpi eq, %arg2, %c0_i32_116 : i32
    %190 = arith.extui %189 : i1 to i32
    %c0_i32_117 = arith.constant 0 : i32
    %191 = arith.cmpi ne, %190, %c0_i32_117 : i32
    scf.if %191 {
      %c0_118 = arith.constant 0 : index
      %c0_119 = arith.constant 0 : index
      %c0_120 = arith.constant 0 : index
      %192 = vector.load %arg12[%c0_118, %c0_119, %c0_120] : memref<4x8x1xf32, #tpu.memory_space<vmem>>, vector<1x8x1xf32>
      %193 = vector.shape_cast %192 : vector<1x8x1xf32> to vector<8x1xf32>
      %cst_121 = arith.constant 1.000000e-30 : f32
      %194 = vector.broadcast %cst_121 : f32 to vector<8x1xf32>
      %195 = arith.maximumf %193, %194 : vector<8x1xf32>
      %196 = tpu.reciprocal %195 {approx = true} : vector<8x1xf32> -> vector<8x1xf32>
      %c0_122 = arith.constant 0 : index
      %c0_123 = arith.constant 0 : index
      %c0_124 = arith.constant 0 : index
      %197 = vector.load %arg13[%c0_122, %c0_123, %c0_124] : memref<4x8x8xf32, #tpu.memory_space<vmem>>, vector<1x8x8xf32>
      %198 = vector.shape_cast %197 : vector<1x8x8xf32> to vector<8x8xf32>
      %199 = vector.broadcast %196 : vector<8x1xf32> to vector<8x8xf32>
      %200 = arith.mulf %198, %199 : vector<8x8xf32>
      %c1_125 = arith.constant 1 : index
      %c0_126 = arith.constant 0 : index
      %c0_127 = arith.constant 0 : index
      %201 = vector.load %arg12[%c1_125, %c0_126, %c0_127] : memref<4x8x1xf32, #tpu.memory_space<vmem>>, vector<1x8x1xf32>
      %202 = vector.shape_cast %201 : vector<1x8x1xf32> to vector<8x1xf32>
      %cst_128 = arith.constant 1.000000e-30 : f32
      %203 = vector.broadcast %cst_128 : f32 to vector<8x1xf32>
      %204 = arith.maximumf %202, %203 : vector<8x1xf32>
      %205 = tpu.reciprocal %204 {approx = true} : vector<8x1xf32> -> vector<8x1xf32>
      %c1_129 = arith.constant 1 : index
      %c0_130 = arith.constant 0 : index
      %c0_131 = arith.constant 0 : index
      %206 = vector.load %arg13[%c1_129, %c0_130, %c0_131] : memref<4x8x8xf32, #tpu.memory_space<vmem>>, vector<1x8x8xf32>
      %207 = vector.shape_cast %206 : vector<1x8x8xf32> to vector<8x8xf32>
      %208 = vector.broadcast %205 : vector<8x1xf32> to vector<8x8xf32>
      %209 = arith.mulf %207, %208 : vector<8x8xf32>
      %c2_132 = arith.constant 2 : index
      %c0_133 = arith.constant 0 : index
      %c0_134 = arith.constant 0 : index
      %210 = vector.load %arg12[%c2_132, %c0_133, %c0_134] : memref<4x8x1xf32, #tpu.memory_space<vmem>>, vector<1x8x1xf32>
      %211 = vector.shape_cast %210 : vector<1x8x1xf32> to vector<8x1xf32>
      %cst_135 = arith.constant 1.000000e-30 : f32
      %212 = vector.broadcast %cst_135 : f32 to vector<8x1xf32>
      %213 = arith.maximumf %211, %212 : vector<8x1xf32>
      %214 = tpu.reciprocal %213 {approx = true} : vector<8x1xf32> -> vector<8x1xf32>
      %c2_136 = arith.constant 2 : index
      %c0_137 = arith.constant 0 : index
      %c0_138 = arith.constant 0 : index
      %215 = vector.load %arg13[%c2_136, %c0_137, %c0_138] : memref<4x8x8xf32, #tpu.memory_space<vmem>>, vector<1x8x8xf32>
      %216 = vector.shape_cast %215 : vector<1x8x8xf32> to vector<8x8xf32>
      %217 = vector.broadcast %214 : vector<8x1xf32> to vector<8x8xf32>
      %218 = arith.mulf %216, %217 : vector<8x8xf32>
      %c3_139 = arith.constant 3 : index
      %c0_140 = arith.constant 0 : index
      %c0_141 = arith.constant 0 : index
      %219 = vector.load %arg12[%c3_139, %c0_140, %c0_141] : memref<4x8x1xf32, #tpu.memory_space<vmem>>, vector<1x8x1xf32>
      %220 = vector.shape_cast %219 : vector<1x8x1xf32> to vector<8x1xf32>
      %cst_142 = arith.constant 1.000000e-30 : f32
      %221 = vector.broadcast %cst_142 : f32 to vector<8x1xf32>
      %222 = arith.maximumf %220, %221 : vector<8x1xf32>
      %223 = tpu.reciprocal %222 {approx = true} : vector<8x1xf32> -> vector<8x1xf32>
      %c3_143 = arith.constant 3 : index
      %c0_144 = arith.constant 0 : index
      %c0_145 = arith.constant 0 : index
      %224 = vector.load %arg13[%c3_143, %c0_144, %c0_145] : memref<4x8x8xf32, #tpu.memory_space<vmem>>, vector<1x8x8xf32>
      %225 = vector.shape_cast %224 : vector<1x8x8xf32> to vector<8x8xf32>
      %226 = vector.broadcast %223 : vector<8x1xf32> to vector<8x8xf32>
      %227 = arith.mulf %225, %226 : vector<8x8xf32>
      %228 = tpu.concatenate %200, %209, %218, %227 in 1 : vector<8x8xf32>, vector<8x8xf32>, vector<8x8xf32>, vector<8x8xf32> -> vector<8x32xf32>
      %c0_146 = arith.constant 0 : index
      %c0_147 = arith.constant 0 : index
      %c0_148 = arith.constant 0 : index
      %229 = vector.load %arg9[%c0_146, %c0_147, %c0_148] : memref<1x8x32xf32, #tpu.memory_space<vmem>>, vector<1x8x32xf32>
      %230 = vector.shape_cast %229 : vector<1x8x32xf32> to vector<8x32xf32>
      %c0_149 = arith.constant 0 : index
      %c0_150 = arith.constant 0 : index
      %231 = vector.load %arg8[%c0_149, %c0_150] : memref<1x32xf32, #tpu.memory_space<vmem>>, vector<1x32xf32>
      %232 = vector.broadcast %231 : vector<1x32xf32> to vector<8x32xf32>
      %233 = arith.addf %230, %232 : vector<8x32xf32>
      %234 = arith.truncf %228 : vector<8x32xf32> to vector<8x32xbf16>
      %c0_151 = arith.constant 0 : index
      %c0_152 = arith.constant 0 : index
      %235 = vector.load %arg7[%c0_151, %c0_152] : memref<32x32xbf16, #tpu.memory_space<vmem>>, vector<32x32xbf16>
      %cst_153 = arith.constant dense<0.000000e+00> : vector<8x32xf32>
      %236 = tpu.matmul %234, %235, %cst_153 {dimension_numbers = #tpu.dot_dimension_numbers<[1], [0], [0], [1], [0, 0, 1, 1], [], []>} : vector<8x32xbf16>, vector<32x32xbf16>, vector<8x32xf32> -> vector<8x32xf32>
      %237 = arith.addf %233, %236 : vector<8x32xf32>
      %c0_154 = arith.constant 0 : index
      %c0_155 = arith.constant 0 : index
      %c0_156 = arith.constant 0 : index
      %238 = vector.load %arg10[%c0_154, %c0_155, %c0_156] : memref<1x8x32xf32, #tpu.memory_space<vmem>>, vector<1x8x32xf32>
      %239 = vector.shape_cast %238 : vector<1x8x32xf32> to vector<8x32xf32>
      %240 = vector.shape_cast %237 : vector<8x32xf32> to vector<1x8x32xf32>
      tpu.vector_store %arg10[%c0_154, %c0_155, %c0_156], %240 {strides = array<i32>} : memref<1x8x32xf32, #tpu.memory_space<vmem>>, vector<1x8x32xf32>,
    } else {
    }
    return
  }
  func.func @transform_0(%arg0: i32, %arg1: i32, %arg2: i32) -> (i32, i32, i32, i32) {
    %c0_i32 = arith.constant 0 : i32
    %c0_i32_0 = arith.constant 0 : i32
    %c0_i32_1 = arith.constant 0 : i32
    return %arg0, %c0_i32, %arg1, %c0_i32_0 : i32, i32, i32, i32
  }
  func.func @transform_1(%arg0: i32, %arg1: i32, %arg2: i32) -> (i32, i32, i32, i32) {
    %c0_i32 = arith.constant 0 : i32
    %c0_i32_0 = arith.constant 0 : i32
    %c0_i32_1 = arith.constant 0 : i32
    return %arg0, %c0_i32, %arg2, %c0_i32_0 : i32, i32, i32, i32
  }
  func.func @transform_2(%arg0: i32, %arg1: i32, %arg2: i32) -> (i32, i32, i32, i32) {
    %c0_i32 = arith.constant 0 : i32
    %c0_i32_0 = arith.constant 0 : i32
    %c0_i32_1 = arith.constant 0 : i32
    return %arg0, %c0_i32, %arg2, %c0_i32_0 : i32, i32, i32, i32
  }
  func.func @transform_3(%arg0: i32, %arg1: i32, %arg2: i32) -> (i32, i32, i32, i32) {
    %c0_i32 = arith.constant 0 : i32
    %c0_i32_0 = arith.constant 0 : i32
    return %arg0, %c0_i32, %arg1, %arg2 : i32, i32, i32, i32
  }
  func.func @transform_4(%arg0: i32, %arg1: i32, %arg2: i32) -> (i32, i32) {
    %c0_i32 = arith.constant 0 : i32
    %c0_i32_0 = arith.constant 0 : i32
    %c0_i32_1 = arith.constant 0 : i32
    return %c0_i32, %c0_i32_0 : i32, i32
  }
  func.func @transform_5(%arg0: i32, %arg1: i32, %arg2: i32) -> (i32, i32) {
    %c0_i32 = arith.constant 0 : i32
    %c0_i32_0 = arith.constant 0 : i32
    %c0_i32_1 = arith.constant 0 : i32
    return %c0_i32, %c0_i32_0 : i32, i32
  }
  func.func @transform_6(%arg0: i32, %arg1: i32, %arg2: i32) -> (i32, i32, i32) {
    %c0_i32 = arith.constant 0 : i32
    %c0_i32_0 = arith.constant 0 : i32
    return %arg0, %arg1, %c0_i32 : i32, i32, i32
  }
  func.func @transform_7(%arg0: i32, %arg1: i32, %arg2: i32) -> (i32, i32, i32) {
    %c0_i32 = arith.constant 0 : i32
    %c0_i32_0 = arith.constant 0 : i32
    return %arg0, %arg1, %c0_i32 : i32, i32, i32
  }
}

module attributes {stable_mosaic.version = 11 : i64} {
  func.func @ln_matmul_kernel(%arg0: i32, %arg1: i32, %arg2: memref<16x32xf32, #tpu.memory_space<vmem>>, %arg3: memref<1x32xf32, #tpu.memory_space<vmem>>, %arg4: memref<1x32xf32, #tpu.memory_space<vmem>>, %arg5: memref<32x128xbf16, #tpu.memory_space<vmem>>, %arg6: memref<1x128xf32, #tpu.memory_space<vmem>>, %arg7: memref<16x128xbf16, #tpu.memory_space<vmem>>, %arg8: memref<16x32xbf16, #tpu.memory_space<vmem>>) attributes {dimension_semantics = [#tpu.dimension_semantics<parallel>, #tpu.dimension_semantics<arbitrary>], iteration_bounds = array<i64: 1, 1>, scalar_prefetch = 0 : i64, scratch_operands = 1 : i64, tpu.core_type = #tpu.core_type<tc>, window_params = [{transform_indices = @transform_0, window_bounds = array<i64: 16, 32>}, {pipeline_mode = #tpu.pipeline_mode<synchronous>, transform_indices = @transform_1, window_bounds = array<i64: 1, 32>}, {pipeline_mode = #tpu.pipeline_mode<synchronous>, transform_indices = @transform_2, window_bounds = array<i64: 1, 32>}, {transform_indices = @transform_3, window_bounds = array<i64: 32, 128>}, {transform_indices = @transform_4, window_bounds = array<i64: 1, 128>}, {transform_indices = @transform_5, window_bounds = array<i64: 16, 128>}]} {
    %c0_i32 = arith.constant 0 : i32
    %0 = arith.cmpi eq, %arg1, %c0_i32 : i32
    %1 = arith.extui %0 : i1 to i32
    %c0_i32_0 = arith.constant 0 : i32
    %2 = arith.cmpi ne, %1, %c0_i32_0 : i32
    scf.if %2 {
      %c0_9 = arith.constant 0 : index
      %c0_10 = arith.constant 0 : index
      %13 = vector.load %arg2[%c0_9, %c0_10] : memref<16x32xf32, #tpu.memory_space<vmem>>, vector<16x32xf32>
      %cst_11 = arith.constant dense<0.000000e+00> : vector<16xf32>
      %14 = vector.multi_reduction <add>, %13, %cst_11 [1] : vector<16x32xf32> to vector<16xf32>
      %15 = vector.shape_cast %14 : vector<16xf32> to vector<16x1xf32>
      %cst_12 = arith.constant 3.200000e+01 : f32
      %16 = vector.broadcast %cst_12 : f32 to vector<16x1xf32>
      %17 = arith.divf %15, %16 : vector<16x1xf32>
      %18 = vector.broadcast %17 : vector<16x1xf32> to vector<16x32xf32>
      %19 = arith.subf %13, %18 : vector<16x32xf32>
      %20 = arith.mulf %19, %19 : vector<16x32xf32>
      %cst_13 = arith.constant dense<0.000000e+00> : vector<16xf32>
      %21 = vector.multi_reduction <add>, %20, %cst_13 [1] : vector<16x32xf32> to vector<16xf32>
      %22 = vector.shape_cast %21 : vector<16xf32> to vector<16x1xf32>
      %cst_14 = arith.constant 3.200000e+01 : f32
      %23 = vector.broadcast %cst_14 : f32 to vector<16x1xf32>
      %24 = arith.divf %22, %23 : vector<16x1xf32>
      %25 = vector.broadcast %17 : vector<16x1xf32> to vector<16x32xf32>
      %26 = arith.subf %13, %25 : vector<16x32xf32>
      %cst_15 = arith.constant 9.99999974E-6 : f32
      %27 = vector.broadcast %cst_15 : f32 to vector<16x1xf32>
      %28 = arith.addf %24, %27 : vector<16x1xf32>
      %29 = math.rsqrt %28 : vector<16x1xf32>
      %30 = vector.broadcast %29 : vector<16x1xf32> to vector<16x32xf32>
      %31 = arith.mulf %26, %30 : vector<16x32xf32>
      %c0_16 = arith.constant 0 : index
      %c0_17 = arith.constant 0 : index
      %32 = vector.load %arg3[%c0_16, %c0_17] : memref<1x32xf32, #tpu.memory_space<vmem>>, vector<1x32xf32>
      %33 = vector.broadcast %32 : vector<1x32xf32> to vector<16x32xf32>
      %34 = arith.mulf %31, %33 : vector<16x32xf32>
      %c0_18 = arith.constant 0 : index
      %c0_19 = arith.constant 0 : index
      %35 = vector.load %arg4[%c0_18, %c0_19] : memref<1x32xf32, #tpu.memory_space<vmem>>, vector<1x32xf32>
      %36 = vector.broadcast %35 : vector<1x32xf32> to vector<16x32xf32>
      %37 = arith.addf %34, %36 : vector<16x32xf32>
      %38 = arith.truncf %37 : vector<16x32xf32> to vector<16x32xbf16>
      %c0_20 = arith.constant 0 : index
      %c0_21 = arith.constant 0 : index
      %39 = vector.load %arg8[%c0_20, %c0_21] : memref<16x32xbf16, #tpu.memory_space<vmem>>, vector<16x32xbf16>
      tpu.vector_store %arg8[%c0_20, %c0_21], %38 {strides = array<i32>} : memref<16x32xbf16, #tpu.memory_space<vmem>>, vector<16x32xbf16>,
    } else {
    }
    %c0 = arith.constant 0 : index
    %c0_1 = arith.constant 0 : index
    %3 = vector.load %arg8[%c0, %c0_1] : memref<16x32xbf16, #tpu.memory_space<vmem>>, vector<16x32xbf16>
    %c0_2 = arith.constant 0 : index
    %c0_3 = arith.constant 0 : index
    %4 = vector.load %arg5[%c0_2, %c0_3] : memref<32x128xbf16, #tpu.memory_space<vmem>>, vector<32x128xbf16>
    %cst = arith.constant dense<0.000000e+00> : vector<16x128xf32>
    %5 = tpu.matmul %3, %4, %cst {dimension_numbers = #tpu.dot_dimension_numbers<[1], [0], [0], [1], [0, 0, 1, 1], [], []>} : vector<16x32xbf16>, vector<32x128xbf16>, vector<16x128xf32> -> vector<16x128xf32>
    %c0_4 = arith.constant 0 : index
    %c0_5 = arith.constant 0 : index
    %6 = vector.load %arg6[%c0_4, %c0_5] : memref<1x128xf32, #tpu.memory_space<vmem>>, vector<1x128xf32>
    %7 = vector.broadcast %6 : vector<1x128xf32> to vector<16x128xf32>
    %8 = arith.addf %5, %7 : vector<16x128xf32>
    %cst_6 = arith.constant 0.000000e+00 : f32
    %9 = vector.broadcast %cst_6 : f32 to vector<16x128xf32>
    %10 = arith.maximumf %8, %9 : vector<16x128xf32>
    %11 = arith.truncf %10 : vector<16x128xf32> to vector<16x128xbf16>
    %c0_7 = arith.constant 0 : index
    %c0_8 = arith.constant 0 : index
    %12 = vector.load %arg7[%c0_7, %c0_8] : memref<16x128xbf16, #tpu.memory_space<vmem>>, vector<16x128xbf16>
    tpu.vector_store %arg7[%c0_7, %c0_8], %11 {strides = array<i32>} : memref<16x128xbf16, #tpu.memory_space<vmem>>, vector<16x128xbf16>,
    return
  }
  func.func @transform_0(%arg0: i32, %arg1: i32) -> (i32, i32) {
    %c0_i32 = arith.constant 0 : i32
    %c0_i32_0 = arith.constant 0 : i32
    return %arg0, %c0_i32 : i32, i32
  }
  func.func @transform_1(%arg0: i32, %arg1: i32) -> (i32, i32) {
    %c0_i32 = arith.constant 0 : i32
    %c0_i32_0 = arith.constant 0 : i32
    %c0_i32_1 = arith.constant 0 : i32
    return %c0_i32, %c0_i32_0 : i32, i32
  }
  func.func @transform_2(%arg0: i32, %arg1: i32) -> (i32, i32) {
    %c0_i32 = arith.constant 0 : i32
    %c0_i32_0 = arith.constant 0 : i32
    %c0_i32_1 = arith.constant 0 : i32
    return %c0_i32, %c0_i32_0 : i32, i32
  }
  func.func @transform_3(%arg0: i32, %arg1: i32) -> (i32, i32) {
    %c0_i32 = arith.constant 0 : i32
    %c0_i32_0 = arith.constant 0 : i32
    return %c0_i32, %arg1 : i32, i32
  }
  func.func @transform_4(%arg0: i32, %arg1: i32) -> (i32, i32) {
    %c0_i32 = arith.constant 0 : i32
    %c0_i32_0 = arith.constant 0 : i32
    return %c0_i32, %arg1 : i32, i32
  }
  func.func @transform_5(%arg0: i32, %arg1: i32) -> (i32, i32) {
    %c0_i32 = arith.constant 0 : i32
    return %arg0, %arg1 : i32, i32
  }
}

module attributes {stable_mosaic.version = 11 : i64} {
  func.func @matmul_resid_kernel(%arg0: i32, %arg1: i32, %arg2: i32, %arg3: memref<16x128xbf16, #tpu.memory_space<vmem>>, %arg4: memref<128x32xbf16, #tpu.memory_space<vmem>>, %arg5: memref<1x32xf32, #tpu.memory_space<vmem>>, %arg6: memref<16x32xf32, #tpu.memory_space<vmem>>, %arg7: memref<16x32xf32, #tpu.memory_space<vmem>>, %arg8: memref<16x32xf32, #tpu.memory_space<vmem>>) attributes {dimension_semantics = [#tpu.dimension_semantics<parallel>, #tpu.dimension_semantics<parallel>, #tpu.dimension_semantics<arbitrary>], iteration_bounds = array<i64: 1, 1, 1>, scalar_prefetch = 0 : i64, scratch_operands = 1 : i64, tpu.core_type = #tpu.core_type<tc>, window_params = [{transform_indices = @transform_0, window_bounds = array<i64: 16, 128>}, {transform_indices = @transform_1, window_bounds = array<i64: 128, 32>}, {transform_indices = @transform_2, window_bounds = array<i64: 1, 32>}, {transform_indices = @transform_3, window_bounds = array<i64: 16, 32>}, {transform_indices = @transform_4, window_bounds = array<i64: 16, 32>}]} {
    %c0_i32 = arith.constant 0 : i32
    %0 = arith.cmpi eq, %arg2, %c0_i32 : i32
    %1 = arith.extui %0 : i1 to i32
    %c0_i32_0 = arith.constant 0 : i32
    %2 = arith.cmpi ne, %1, %c0_i32_0 : i32
    scf.if %2 {
      %cst_10 = arith.constant 0.000000e+00 : f32
      %12 = vector.broadcast %cst_10 : f32 to vector<16x32xf32>
      %c0_11 = arith.constant 0 : index
      %c0_12 = arith.constant 0 : index
      %13 = vector.load %arg8[%c0_11, %c0_12] : memref<16x32xf32, #tpu.memory_space<vmem>>, vector<16x32xf32>
      tpu.vector_store %arg8[%c0_11, %c0_12], %12 {strides = array<i32>} : memref<16x32xf32, #tpu.memory_space<vmem>>, vector<16x32xf32>,
    } else {
    }
    %c0 = arith.constant 0 : index
    %c0_1 = arith.constant 0 : index
    %3 = vector.load %arg8[%c0, %c0_1] : memref<16x32xf32, #tpu.memory_space<vmem>>, vector<16x32xf32>
    %c0_2 = arith.constant 0 : index
    %c0_3 = arith.constant 0 : index
    %4 = vector.load %arg3[%c0_2, %c0_3] : memref<16x128xbf16, #tpu.memory_space<vmem>>, vector<16x128xbf16>
    %c0_4 = arith.constant 0 : index
    %c0_5 = arith.constant 0 : index
    %5 = vector.load %arg4[%c0_4, %c0_5] : memref<128x32xbf16, #tpu.memory_space<vmem>>, vector<128x32xbf16>
    %cst = arith.constant dense<0.000000e+00> : vector<16x32xf32>
    %6 = tpu.matmul %4, %5, %cst {dimension_numbers = #tpu.dot_dimension_numbers<[1], [0], [0], [1], [0, 0, 1, 1], [], []>} : vector<16x128xbf16>, vector<128x32xbf16>, vector<16x32xf32> -> vector<16x32xf32>
    %7 = arith.addf %3, %6 : vector<16x32xf32>
    %c0_6 = arith.constant 0 : index
    %c0_7 = arith.constant 0 : index
    %8 = vector.load %arg8[%c0_6, %c0_7] : memref<16x32xf32, #tpu.memory_space<vmem>>, vector<16x32xf32>
    tpu.vector_store %arg8[%c0_6, %c0_7], %7 {strides = array<i32>} : memref<16x32xf32, #tpu.memory_space<vmem>>, vector<16x32xf32>,
    %c0_i32_8 = arith.constant 0 : i32
    %9 = arith.cmpi eq, %arg2, %c0_i32_8 : i32
    %10 = arith.extui %9 : i1 to i32
    %c0_i32_9 = arith.constant 0 : i32
    %11 = arith.cmpi ne, %10, %c0_i32_9 : i32
    scf.if %11 {
      %c0_10 = arith.constant 0 : index
      %c0_11 = arith.constant 0 : index
      %12 = vector.load %arg8[%c0_10, %c0_11] : memref<16x32xf32, #tpu.memory_space<vmem>>, vector<16x32xf32>
      %c0_12 = arith.constant 0 : index
      %c0_13 = arith.constant 0 : index
      %13 = vector.load %arg5[%c0_12, %c0_13] : memref<1x32xf32, #tpu.memory_space<vmem>>, vector<1x32xf32>
      %14 = vector.broadcast %13 : vector<1x32xf32> to vector<16x32xf32>
      %15 = arith.addf %12, %14 : vector<16x32xf32>
      %c0_14 = arith.constant 0 : index
      %c0_15 = arith.constant 0 : index
      %16 = vector.load %arg6[%c0_14, %c0_15] : memref<16x32xf32, #tpu.memory_space<vmem>>, vector<16x32xf32>
      %17 = arith.addf %15, %16 : vector<16x32xf32>
      %c0_16 = arith.constant 0 : index
      %c0_17 = arith.constant 0 : index
      %18 = vector.load %arg7[%c0_16, %c0_17] : memref<16x32xf32, #tpu.memory_space<vmem>>, vector<16x32xf32>
      tpu.vector_store %arg7[%c0_16, %c0_17], %17 {strides = array<i32>} : memref<16x32xf32, #tpu.memory_space<vmem>>, vector<16x32xf32>,
    } else {
    }
    return
  }
  func.func @transform_0(%arg0: i32, %arg1: i32, %arg2: i32) -> (i32, i32) {
    %c0_i32 = arith.constant 0 : i32
    return %arg0, %arg2 : i32, i32
  }
  func.func @transform_1(%arg0: i32, %arg1: i32, %arg2: i32) -> (i32, i32) {
    %c0_i32 = arith.constant 0 : i32
    return %arg2, %arg1 : i32, i32
  }
  func.func @transform_2(%arg0: i32, %arg1: i32, %arg2: i32) -> (i32, i32) {
    %c0_i32 = arith.constant 0 : i32
    %c0_i32_0 = arith.constant 0 : i32
    return %c0_i32, %arg1 : i32, i32
  }
  func.func @transform_3(%arg0: i32, %arg1: i32, %arg2: i32) -> (i32, i32) {
    %c0_i32 = arith.constant 0 : i32
    return %arg0, %arg1 : i32, i32
  }
  func.func @transform_4(%arg0: i32, %arg1: i32, %arg2: i32) -> (i32, i32) {
    %c0_i32 = arith.constant 0 : i32
    return %arg0, %arg1 : i32, i32
  }
}

</mosaic_0001>

<llo_original>
// kernel: encoder_layer_forward.4
$region0: #{encoder_layer_forward.4}
  #allocation0 [shape = 'u32[]', space=smem, size = 0x4, offset = 0x4, fixed_abs, tag = 'smem constant byte address 0x4 - core index']
  #allocation1 [shape = 'u32[144,128]{1,0:T(1,128)}', space=vmem, size = 0x12000, scoped, tag = 'internal scratch']
  #allocation2 [shape = 'bf16[16,32]{1,0:T(16,128)(2,1)}', space=vmem, size = 0x1000, scoped, tag = 'scratch operand']
  %s0 = inlined_call_operand.vmem [shape: f32[16,32], index: 0, kind: input, shape index: {}]
  %s1 = inlined_call_operand.vmem [shape: f32[1,32], index: 1, kind: input, shape index: {}]
  %s2 = inlined_call_operand.vmem [shape: f32[1,32], index: 2, kind: input, shape index: {}]
  %s3 = inlined_call_operand.vmem [shape: bf16[32,96], index: 3, kind: input, shape index: {}]
  %s4 = inlined_call_operand.vmem [shape: f32[1,96], index: 4, kind: input, shape index: {}]
  %s5 = inlined_call_operand.vmem [shape: bf16[16,96], index: 5, kind: output, shape index: {}]
  %s6 = sld [smem:[#allocation0]]
  $region34: #{encoder_layer_forward.4} parent=0
    _
  %s8 = ssub.s32 1, %s6
  %s9 = scalar_select 0, %s8, %s6
  // Predicated region
  $region2: #{encoder_layer_forward.4} parent=0 // pred_check
    _
  $region3: #{encoder_layer_forward.4} parent=0 // pred_check_branch
    %11 = sbr.rel (0) target = $region5
  $region4: #{encoder_layer_forward.4} parent=0 // pred_region
    _
  $region5: #{encoder_layer_forward.4} parent=0 // pred_fallthru
    _
  // Predicated region
  $region6: #{encoder_layer_forward.4} parent=0 // pred_check
    _
  $region7: #{encoder_layer_forward.4} parent=0 // pred_check_branch
    %13 = sbr.rel (0) target = $region9
  $region8: #{encoder_layer_forward.4} parent=0 // pred_region
    _
  $region9: #{encoder_layer_forward.4} parent=0 // pred_fallthru
    _
  // Predicated region
  $region10: #{encoder_layer_forward.4} parent=0 // pred_check
    _
  $region11: #{encoder_layer_forward.4} parent=0 // pred_check_branch
    %15 = sbr.rel (0) target = $region13
  $region12: #{encoder_layer_forward.4} parent=0 // pred_region
    _
  $region13: #{encoder_layer_forward.4} parent=0 // pred_fallthru
    _
  // Predicated region
  $region14: #{encoder_layer_forward.4} parent=0 // pred_check
    _
  $region15: #{encoder_layer_forward.4} parent=0 // pred_check_branch
    %17 = sbr.rel (0) target = $region17
  $region16: #{encoder_layer_forward.4} parent=0 // pred_region
    _
  $region17: #{encoder_layer_forward.4} parent=0 // pred_fallthru
    _
  // Predicated region
  $region18: #{encoder_layer_forward.4} parent=0 // pred_check
    _
  $region19: #{encoder_layer_forward.4} parent=0 // pred_check_branch
    %19 = sbr.rel (0) target = $region21
  $region20: #{encoder_layer_forward.4} parent=0 // pred_region
    _
  $region21: #{encoder_layer_forward.4} parent=0 // pred_fallthru
    _
  %p21 = scmp.eq.s32.totalorder 0, 0
  // Predicated region
  $region22: #{encoder_layer_forward.4} parent=0 // pred_check
    %p22 = pneg %p21
  $region23: #{encoder_layer_forward.4} parent=0 // pred_check_branch
    %24 = sbr.rel (%p22) target = $region25
  $region24: #{encoder_layer_forward.4} parent=0 // pred_region
    %v25 = vld [vmem:[%s0] sm:$0xff]
    %v26 = vld [vmem:[%s0 + $0x8] sm:$0xff]
    %vm27 = vcmask 261120
    %v28 = vsel %vm27, %v25, 0.0
    %29 = vadd.xlane.f32.xlu0 %v28
    %v30 = vpop.xlane.xlu0 %29
    %v31 = vsel %vm27, %v26, 0.0
    %32 = vadd.xlane.f32.xlu0 %v31
    %v33 = vpop.xlane.xlu0 %32
    %v34 = vrcp.pop 32.0
    %v35 = vmul.f32 %v30, %v34
    %v36 = vmul.f32 %v33, %v34
    %v37 = vsub.f32 %v25, %v35
    %v38 = vsub.f32 %v26, %v36
    %v39 = vmul.f32 %v37, %v37
    %v40 = vmul.f32 %v38, %v38
    %v41 = vsel %vm27, %v39, 0.0
    %42 = vadd.xlane.f32.xlu0 %v41
    %v43 = vpop.xlane.xlu0 %42
    %v44 = vsel %vm27, %v40, 0.0
    %45 = vadd.xlane.f32.xlu0 %v44
    %v46 = vpop.xlane.xlu0 %45
    %v47 = vmul.f32 %v43, %v34
    %v48 = vmul.f32 %v46, %v34
    %v49 = vadd.f32 %v47, 1e-05
    %v50 = vadd.f32 %v48, 1e-05
    %v51 = vrsqrt.pop %v49
    %v52 = vrsqrt.pop %v50
    %v53 = vmul.f32 %v37, %v51
    %v54 = vmul.f32 %v38, %v52
    %v55 = vld [vmem:[%s1] sm:$0x1]
    %v57 = vlaneseq
    %v58 = vshrl.u32 %v57, 7
    %v59 = vsub.s32 0, %v58
    %v60 = vrot.slane %v55, %v59
    %v62 = vmul.f32 %v53, %v60
    %v63 = vmul.f32 %v54, %v60
    %v64 = vld [vmem:[%s2] sm:$0x1]
    %v66 = vlaneseq
    %v67 = vshrl.u32 %v66, 7
    %v68 = vsub.s32 0, %v67
    %v69 = vrot.slane %v64, %v68
    %v71 = vadd.f32 %v62, %v69
    %v72 = vadd.f32 %v63, %v69
    %v73 = vpack.c.bf16 %v72, %v71
    %74 = vst.msk [vmem:[#allocation2] sm:$0xff] %vm27, %v73
  $region25: #{encoder_layer_forward.4} parent=0 // pred_fallthru
    _
  %v75 = vld [vmem:[#allocation2] sm:$0xff]
  %v76 = vld [vmem:[%s3] sm:$0xf]
  %v77 = vld [vmem:[%s3 + $0x4] sm:$0xf]
  %v78 = vld [vmem:[%s3 + $0x8] sm:$0xf]
  %v79 = vld [vmem:[%s3 + $0xc] sm:$0xf]
  %v80 = vld [vmem:[%s4] sm:$0x1]
  %v82 = vlaneseq
  %v83 = vshrl.u32 %v82, 7
  %v84 = vsub.s32 0, %v83
  %v85 = vrot.slane %v80, %v84
  %v91 = vunpack.c.l.b16 %v76
  %v92 = vunpack.c.l.b16 %v77
  %v93 = vunpack.c.l.b16 %v78
  %v94 = vunpack.c.l.b16 %v79
  %v95 = vpack.c.b16 %v92, %v91
  %v96 = vpack.c.b16 %v94, %v93
  %vm99 = vcmask 261120
  %v101 = vsel %vm99, %v75, 0
  %103 = vmatprep.subr.bf16.mxu0 0
  %104 = vmatpush1.bf16.msra.mxu0 %v95
  %105 = vmatprep.subr.bf16.mxu0 0
  %106 = vmatpush1.bf16.msra.mxu0 %v96
  %107 = vmatprep.subr.bf16.mxu0 0
  %108 = vmatpush1.bf16.msra.mxu0 0
  %109 = vmatprep.subr.bf16.mxu0 0
  %110 = vmatpush1.bf16.msra.mxu0 0
  %111 = vmatprep.subr.bf16.mxu0 0
  %112 = vmatpush1.bf16.msra.mxu0 0
  %113 = vmatprep.subr.bf16.mxu0 0
  %114 = vmatpush1.bf16.msra.mxu0 0
  %115 = vmatprep.subr.bf16.mxu0 0
  %116 = vmatpush1.bf16.msra.mxu0 0
  %117 = vmatprep.subr.bf16.mxu0 0
  %118 = vmatpush1.bf16.msra.mxu0 0
  %119 = vmatprep.subr.bf16.mxu0 0
  %120 = vmatpush1.bf16.msra.mxu0 0
  %121 = vmatprep.subr.bf16.mxu0 0
  %122 = vmatpush1.bf16.msra.mxu0 0
  %123 = vmatprep.subr.bf16.mxu0 0
  %124 = vmatpush1.bf16.msra.mxu0 0
  %125 = vmatprep.subr.bf16.mxu0 0
  %126 = vmatpush1.bf16.msra.mxu0 0
  %127 = vmatprep.subr.bf16.mxu0 0
  %128 = vmatpush1.bf16.msra.mxu0 0
  %129 = vmatprep.subr.bf16.mxu0 0
  %130 = vmatpush1.bf16.msra.mxu0 0
  %131 = vmatprep.subr.bf16.mxu0 0
  %132 = vmatpush1.bf16.msra.mxu0 0
  %133 = vmatprep.subr.bf16.mxu0 0
  %134 = vmatpush1.bf16.msra.mxu0 0
  %135 = vmatprep.mubr.bf16.mxu0 0
  %136 = vmatmul.mubr.bf16.gmra.mrb[0].mxu0 %v101
  %v137 = vpop.f32.mrb[0].mxu0
  %v138 = vadd.f32 %v85, %v137
  %v139 = vpop.f32.mrb[0].mxu0
  %v140 = vpop.f32.mrb[0].mxu0
  %v141 = vadd.f32 %v85, %v140
  %v142 = vpop.f32.mrb[0].mxu0
  %143 = vdwg.mxu0
  %v144 = vpack.c.bf16 %v141, %v138
  %v146 = vunpack.c.l.b16 %v144
  %v147 = vunpack.c.h.b16 %v144
  %v148 = vpack.c.b16 %v146, %v146
  %v149 = vpack.c.b16 %v147, %v147
  %vm152 = vcmask 781312
  %153 = vst.msk [vmem:[%s5] sm:$0xf] %vm152, %v148
  %154 = vst.msk [vmem:[%s5 + $0x4] sm:$0xf] %vm152, %v149
  // Predicated region
  $region26: #{encoder_layer_forward.4} parent=0 // pred_check
    _
  $region27: #{encoder_layer_forward.4} parent=0 // pred_check_branch
    %156 = sbr.rel (0) target = $region29
  $region28: #{encoder_layer_forward.4} parent=0 // pred_region
    _
  $region29: #{encoder_layer_forward.4} parent=0 // pred_fallthru
    _
  // Predicated region
  $region30: #{encoder_layer_forward.4} parent=0 // pred_check
    _
  $region31: #{encoder_layer_forward.4} parent=0 // pred_check_branch
    %158 = sbr.rel (0) target = $region33
  $region32: #{encoder_layer_forward.4} parent=0 // pred_region
    _
  $region33: #{encoder_layer_forward.4} parent=0 // pred_fallthru
    _

// kernel: encoder_layer_forward.6
$region0: #{encoder_layer_forward.6}
  #allocation0 [shape = 'u32[]', space=smem, size = 0x4, offset = 0x4, fixed_abs, tag = 'smem constant byte address 0x4 - core index']
  #allocation1 [shape = 'u32[144,128]{1,0:T(1,128)}', space=vmem, size = 0x12000, scoped, tag = 'internal scratch']
  #allocation2 [shape = 'bf16[16,32]{1,0:T(16,128)(2,1)}', space=vmem, size = 0x1000, scoped, tag = 'scratch operand']
  %s0 = inlined_call_operand.vmem [shape: f32[16,32], index: 0, kind: input, shape index: {}]
  %s1 = inlined_call_operand.vmem [shape: f32[1,32], index: 1, kind: input, shape index: {}]
  %s2 = inlined_call_operand.vmem [shape: f32[1,32], index: 2, kind: input, shape index: {}]
  %s3 = inlined_call_operand.vmem [shape: bf16[32,128], index: 3, kind: input, shape index: {}]
  %s4 = inlined_call_operand.vmem [shape: f32[1,128], index: 4, kind: input, shape index: {}]
  %s5 = inlined_call_operand.vmem [shape: bf16[16,128], index: 5, kind: output, shape index: {}]
  %s6 = sld [smem:[#allocation0]]
  $region34: #{encoder_layer_forward.6} parent=0
    _
  %s8 = ssub.s32 1, %s6
  %s9 = scalar_select 0, %s8, %s6
  // Predicated region
  $region2: #{encoder_layer_forward.6} parent=0 // pred_check
    _
  $region3: #{encoder_layer_forward.6} parent=0 // pred_check_branch
    %11 = sbr.rel (0) target = $region5
  $region4: #{encoder_layer_forward.6} parent=0 // pred_region
    _
  $region5: #{encoder_layer_forward.6} parent=0 // pred_fallthru
    _
  // Predicated region
  $region6: #{encoder_layer_forward.6} parent=0 // pred_check
    _
  $region7: #{encoder_layer_forward.6} parent=0 // pred_check_branch
    %13 = sbr.rel (0) target = $region9
  $region8: #{encoder_layer_forward.6} parent=0 // pred_region
    _
  $region9: #{encoder_layer_forward.6} parent=0 // pred_fallthru
    _
  // Predicated region
  $region10: #{encoder_layer_forward.6} parent=0 // pred_check
    _
  $region11: #{encoder_layer_forward.6} parent=0 // pred_check_branch
    %15 = sbr.rel (0) target = $region13
  $region12: #{encoder_layer_forward.6} parent=0 // pred_region
    _
  $region13: #{encoder_layer_forward.6} parent=0 // pred_fallthru
    _
  // Predicated region
  $region14: #{encoder_layer_forward.6} parent=0 // pred_check
    _
  $region15: #{encoder_layer_forward.6} parent=0 // pred_check_branch
    %17 = sbr.rel (0) target = $region17
  $region16: #{encoder_layer_forward.6} parent=0 // pred_region
    _
  $region17: #{encoder_layer_forward.6} parent=0 // pred_fallthru
    _
  // Predicated region
  $region18: #{encoder_layer_forward.6} parent=0 // pred_check
    _
  $region19: #{encoder_layer_forward.6} parent=0 // pred_check_branch
    %19 = sbr.rel (0) target = $region21
  $region20: #{encoder_layer_forward.6} parent=0 // pred_region
    _
  $region21: #{encoder_layer_forward.6} parent=0 // pred_fallthru
    _
  %p21 = scmp.eq.s32.totalorder 0, 0
  // Predicated region
  $region22: #{encoder_layer_forward.6} parent=0 // pred_check
    %p22 = pneg %p21
  $region23: #{encoder_layer_forward.6} parent=0 // pred_check_branch
    %24 = sbr.rel (%p22) target = $region25
  $region24: #{encoder_layer_forward.6} parent=0 // pred_region
    %v25 = vld [vmem:[%s0] sm:$0xff]
    %v26 = vld [vmem:[%s0 + $0x8] sm:$0xff]
    %vm27 = vcmask 261120
    %v28 = vsel %vm27, %v25, 0.0
    %29 = vadd.xlane.f32.xlu0 %v28
    %v30 = vpop.xlane.xlu0 %29
    %v31 = vsel %vm27, %v26, 0.0
    %32 = vadd.xlane.f32.xlu0 %v31
    %v33 = vpop.xlane.xlu0 %32
    %v34 = vrcp.pop 32.0
    %v35 = vmul.f32 %v30, %v34
    %v36 = vmul.f32 %v33, %v34
    %v37 = vsub.f32 %v25, %v35
    %v38 = vsub.f32 %v26, %v36
    %v39 = vmul.f32 %v37, %v37
    %v40 = vmul.f32 %v38, %v38
    %v41 = vsel %vm27, %v39, 0.0
    %42 = vadd.xlane.f32.xlu0 %v41
    %v43 = vpop.xlane.xlu0 %42
    %v44 = vsel %vm27, %v40, 0.0
    %45 = vadd.xlane.f32.xlu0 %v44
    %v46 = vpop.xlane.xlu0 %45
    %v47 = vmul.f32 %v43, %v34
    %v48 = vmul.f32 %v46, %v34
    %v49 = vadd.f32 %v47, 1e-05
    %v50 = vadd.f32 %v48, 1e-05
    %v51 = vrsqrt.pop %v49
    %v52 = vrsqrt.pop %v50
    %v53 = vmul.f32 %v37, %v51
    %v54 = vmul.f32 %v38, %v52
    %v55 = vld [vmem:[%s1] sm:$0x1]
    %v57 = vlaneseq
    %v58 = vshrl.u32 %v57, 7
    %v59 = vsub.s32 0, %v58
    %v60 = vrot.slane %v55, %v59
    %v62 = vmul.f32 %v53, %v60
    %v63 = vmul.f32 %v54, %v60
    %v64 = vld [vmem:[%s2] sm:$0x1]
    %v66 = vlaneseq
    %v67 = vshrl.u32 %v66, 7
    %v68 = vsub.s32 0, %v67
    %v69 = vrot.slane %v64, %v68
    %v71 = vadd.f32 %v62, %v69
    %v72 = vadd.f32 %v63, %v69
    %v73 = vpack.c.bf16 %v72, %v71
    %74 = vst.msk [vmem:[#allocation2] sm:$0xff] %vm27, %v73
  $region25: #{encoder_layer_forward.6} parent=0 // pred_fallthru
    _
  %v75 = vld [vmem:[#allocation2] sm:$0xff]
  %v76 = vld [vmem:[%s3] sm:$0xf]
  %v77 = vld [vmem:[%s3 + $0x4] sm:$0xf]
  %v78 = vld [vmem:[%s3 + $0x8] sm:$0xf]
  %v79 = vld [vmem:[%s3 + $0xc] sm:$0xf]
  %v80 = vld [vmem:[%s4] sm:$0x1]
  %v82 = vlaneseq
  %v83 = vshrl.u32 %v82, 7
  %v84 = vsub.s32 0, %v83
  %v85 = vrot.slane %v80, %v84
  %v91 = vunpack.c.l.b16 %v76
  %v92 = vunpack.c.l.b16 %v77
  %v93 = vunpack.c.l.b16 %v78
  %v94 = vunpack.c.l.b16 %v79
  %v95 = vpack.c.b16 %v92, %v91
  %v96 = vpack.c.b16 %v94, %v93
  %vm99 = vcmask 261120
  %v101 = vsel %vm99, %v75, 0
  %103 = vmatprep.subr.bf16.mxu0 0
  %104 = vmatpush1.bf16.msra.mxu0 %v95
  %105 = vmatprep.subr.bf16.mxu0 0
  %106 = vmatpush1.bf16.msra.mxu0 %v96
  %107 = vmatprep.subr.bf16.mxu0 0
  %108 = vmatpush1.bf16.msra.mxu0 0
  %109 = vmatprep.subr.bf16.mxu0 0
  %110 = vmatpush1.bf16.msra.mxu0 0
  %111 = vmatprep.subr.bf16.mxu0 0
  %112 = vmatpush1.bf16.msra.mxu0 0
  %113 = vmatprep.subr.bf16.mxu0 0
  %114 = vmatpush1.bf16.msra.mxu0 0
  %115 = vmatprep.subr.bf16.mxu0 0
  %116 = vmatpush1.bf16.msra.mxu0 0
  %117 = vmatprep.subr.bf16.mxu0 0
  %118 = vmatpush1.bf16.msra.mxu0 0
  %119 = vmatprep.subr.bf16.mxu0 0
  %120 = vmatpush1.bf16.msra.mxu0 0
  %121 = vmatprep.subr.bf16.mxu0 0
  %122 = vmatpush1.bf16.msra.mxu0 0
  %123 = vmatprep.subr.bf16.mxu0 0
  %124 = vmatpush1.bf16.msra.mxu0 0
  %125 = vmatprep.subr.bf16.mxu0 0
  %126 = vmatpush1.bf16.msra.mxu0 0
  %127 = vmatprep.subr.bf16.mxu0 0
  %128 = vmatpush1.bf16.msra.mxu0 0
  %129 = vmatprep.subr.bf16.mxu0 0
  %130 = vmatpush1.bf16.msra.mxu0 0
  %131 = vmatprep.subr.bf16.mxu0 0
  %132 = vmatpush1.bf16.msra.mxu0 0
  %133 = vmatprep.subr.bf16.mxu0 0
  %134 = vmatpush1.bf16.msra.mxu0 0
  %135 = vmatprep.mubr.bf16.mxu0 0
  %136 = vmatmul.mubr.bf16.gmra.mrb[0].mxu0 %v101
  %v137 = vpop.f32.mrb[0].mxu0
  %v138 = vadd.f32 %v85, %v137
  %v139 = vpop.f32.mrb[0].mxu0
  %v140 = vpop.f32.mrb[0].mxu0
  %v141 = vadd.f32 %v85, %v140
  %v142 = vpop.f32.mrb[0].mxu0
  %143 = vdwg.mxu0
  %v144 = vmax.f32 %v138, 0.0
  %v145 = vmax.f32 %v141, 0.0
  %v146 = vpack.c.bf16 %v145, %v144
  %v148 = vunpack.c.l.b16 %v146
  %v149 = vunpack.c.h.b16 %v146
  %v150 = vpack.c.b16 %v148, %v148
  %v151 = vpack.c.b16 %v149, %v149
  %154 = vst [vmem:[%s5] sm:$0xf] %v150
  %155 = vst [vmem:[%s5 + $0x4] sm:$0xf] %v151
  // Predicated region
  $region26: #{encoder_layer_forward.6} parent=0 // pred_check
    _
  $region27: #{encoder_layer_forward.6} parent=0 // pred_check_branch
    %157 = sbr.rel (0) target = $region29
  $region28: #{encoder_layer_forward.6} parent=0 // pred_region
    _
  $region29: #{encoder_layer_forward.6} parent=0 // pred_fallthru
    _
  // Predicated region
  $region30: #{encoder_layer_forward.6} parent=0 // pred_check
    _
  $region31: #{encoder_layer_forward.6} parent=0 // pred_check_branch
    %159 = sbr.rel (0) target = $region33
  $region32: #{encoder_layer_forward.6} parent=0 // pred_region
    _
  $region33: #{encoder_layer_forward.6} parent=0 // pred_fallthru
    _

// kernel: encoder_layer_forward.7
$region0: #{encoder_layer_forward.7}
  #allocation0 [shape = 'u32[]', space=smem, size = 0x4, offset = 0x4, fixed_abs, tag = 'smem constant byte address 0x4 - core index']
  #allocation1 [shape = 'u32[144,128]{1,0:T(1,128)}', space=vmem, size = 0x12000, scoped, tag = 'internal scratch']
  #allocation2 [shape = 'f32[16,32]{1,0:T(8,128)}', space=vmem, size = 0x2000, scoped, tag = 'scratch operand']
  %s0 = inlined_call_operand.vmem [shape: bf16[16,128], index: 0, kind: input, shape index: {}]
  %s1 = inlined_call_operand.vmem [shape: bf16[128,32], index: 1, kind: input, shape index: {}]
  %s2 = inlined_call_operand.vmem [shape: f32[1,32], index: 2, kind: input, shape index: {}]
  %s3 = inlined_call_operand.vmem [shape: f32[16,32], index: 3, kind: input, shape index: {}]
  %s4 = inlined_call_operand.hbm [shape: f32[16,32], index: 4, kind: output, shape index: {}]
  %s5 = sld [smem:[#allocation0]]
  $region34: #{encoder_layer_forward.7} parent=0
    _
  %s7 = ssub.s32 1, %s5
  %s8 = scalar_select 0, %s7, %s5
  $region1: #{encoder_layer_forward.7} parent=0
    #allocation3 [shape = 'u8[8192]{0}', space=vmem, size = 0x2000, scoped, tag = 'output window, operand 0, single buffered']
    #allocation4 [shape = 's32[1]{0}', space=sflag, size = 0x4, scoped, tag = 'scoped memory for encoder_layer_forward.7']
    %9 = vsyncpa [#allocation4], 0
    // Predicated region
    $region2: #{encoder_layer_forward.7} parent=1 // pred_check
      _
    $region3: #{encoder_layer_forward.7} parent=1 // pred_check_branch
      %11 = sbr.rel (0) target = $region5
    $region4: #{encoder_layer_forward.7} parent=1 // pred_region
      _
    $region5: #{encoder_layer_forward.7} parent=1 // pred_fallthru
      _
    // Predicated region
    $region6: #{encoder_layer_forward.7} parent=1 // pred_check
      _
    $region7: #{encoder_layer_forward.7} parent=1 // pred_check_branch
      %13 = sbr.rel (0) target = $region9
    $region8: #{encoder_layer_forward.7} parent=1 // pred_region
      _
    $region9: #{encoder_layer_forward.7} parent=1 // pred_fallthru
      _
    // Predicated region
    $region10: #{encoder_layer_forward.7} parent=1 // pred_check
      _
    $region11: #{encoder_layer_forward.7} parent=1 // pred_check_branch
      %15 = sbr.rel (0) target = $region13
    $region12: #{encoder_layer_forward.7} parent=1 // pred_region
      _
    $region13: #{encoder_layer_forward.7} parent=1 // pred_fallthru
      _
    // Predicated region
    $region14: #{encoder_layer_forward.7} parent=1 // pred_check
      _
    $region15: #{encoder_layer_forward.7} parent=1 // pred_check_branch
      %17 = sbr.rel (0) target = $region17
    $region16: #{encoder_layer_forward.7} parent=1 // pred_region
      _
    $region17: #{encoder_layer_forward.7} parent=1 // pred_fallthru
      _
    %p19 = scmp.eq.s32.totalorder 0, 0
    // Predicated region
    $region18: #{encoder_layer_forward.7} parent=1 // pred_check
      %p20 = pneg %p19
    $region19: #{encoder_layer_forward.7} parent=1 // pred_check_branch
      %22 = sbr.rel (%p20) target = $region21
    $region20: #{encoder_layer_forward.7} parent=1 // pred_region
      %vm23 = vcmask 261120
      %24 = vst.msk [vmem:[#allocation2] sm:$0xff] %vm23, 0.0
      %25 = vst.msk [vmem:[#allocation2 + $0x8] sm:$0xff] %vm23, 0.0
    $region21: #{encoder_layer_forward.7} parent=1 // pred_fallthru
      _
    %v26 = vld [vmem:[#allocation2] sm:$0xff]
    %v27 = vld [vmem:[#allocation2 + $0x8] sm:$0xff]
    %v28 = vld [vmem:[%s0] sm:$0xf]
    %v29 = vld [vmem:[%s0 + $0x4] sm:$0xf]
    %v30 = vld [vmem:[%s1] sm:$0xf]
    %v31 = vld [vmem:[%s1 + $0x4] sm:$0xf]
    %v32 = vld [vmem:[%s1 + $0x8] sm:$0xf]
    %v33 = vld [vmem:[%s1 + $0xc] sm:$0xf]
    %v34 = vld [vmem:[%s1 + $0x10] sm:$0xf]
    %v35 = vld [vmem:[%s1 + $0x14] sm:$0xf]
    %v36 = vld [vmem:[%s1 + $0x18] sm:$0xf]
    %v37 = vld [vmem:[%s1 + $0x1c] sm:$0xf]
    %v38 = vld [vmem:[%s1 + $0x20] sm:$0xf]
    %v39 = vld [vmem:[%s1 + $0x24] sm:$0xf]
    %v40 = vld [vmem:[%s1 + $0x28] sm:$0xf]
    %v41 = vld [vmem:[%s1 + $0x2c] sm:$0xf]
    %v42 = vld [vmem:[%s1 + $0x30] sm:$0xf]
    %v43 = vld [vmem:[%s1 + $0x34] sm:$0xf]
    %v44 = vld [vmem:[%s1 + $0x38] sm:$0xf]
    %v45 = vld [vmem:[%s1 + $0x3c] sm:$0xf]
    %v48 = vunpack.c.l.b16 %v28
    %v49 = vunpack.c.l.b16 %v29
    %v50 = vpack.c.b16 %v49, %v48
    %v68 = vunpack.c.l.b16 %v30
    %v69 = vunpack.c.l.b16 %v31
    %v70 = vunpack.c.l.b16 %v32
    %v71 = vunpack.c.l.b16 %v33
    %v72 = vunpack.c.l.b16 %v34
    %v73 = vunpack.c.l.b16 %v35
    %v74 = vunpack.c.l.b16 %v36
    %v75 = vunpack.c.l.b16 %v37
    %v76 = vunpack.c.l.b16 %v38
    %v77 = vunpack.c.l.b16 %v39
    %v78 = vunpack.c.l.b16 %v40
    %v79 = vunpack.c.l.b16 %v41
    %v80 = vunpack.c.l.b16 %v42
    %v81 = vunpack.c.l.b16 %v43
    %v82 = vunpack.c.l.b16 %v44
    %v83 = vunpack.c.l.b16 %v45
    %v84 = vpack.c.b16 %v69, %v68
    %v85 = vpack.c.b16 %v71, %v70
    %v86 = vpack.c.b16 %v73, %v72
    %v87 = vpack.c.b16 %v75, %v74
    %v88 = vpack.c.b16 %v77, %v76
    %v89 = vpack.c.b16 %v79, %v78
    %v90 = vpack.c.b16 %v81, %v80
    %v91 = vpack.c.b16 %v83, %v82
    %100 = vmatprep.subr.bf16.mxu0 0
    %101 = vmatpush1.bf16.msra.mxu0 %v84
    %102 = vmatprep.subr.bf16.mxu0 0
    %103 = vmatpush1.bf16.msra.mxu0 %v85
    %104 = vmatprep.subr.bf16.mxu0 0
    %105 = vmatpush1.bf16.msra.mxu0 %v86
    %106 = vmatprep.subr.bf16.mxu0 0
    %107 = vmatpush1.bf16.msra.mxu0 %v87
    %108 = vmatprep.subr.bf16.mxu0 0
    %109 = vmatpush1.bf16.msra.mxu0 %v88
    %110 = vmatprep.subr.bf16.mxu0 0
    %111 = vmatpush1.bf16.msra.mxu0 %v89
    %112 = vmatprep.subr.bf16.mxu0 0
    %113 = vmatpush1.bf16.msra.mxu0 %v90
    %114 = vmatprep.subr.bf16.mxu0 0
    %115 = vmatpush1.bf16.msra.mxu0 %v91
    %116 = vmatprep.subr.bf16.mxu0 0
    %117 = vmatpush1.bf16.msra.mxu0 0
    %118 = vmatprep.subr.bf16.mxu0 0
    %119 = vmatpush1.bf16.msra.mxu0 0
    %120 = vmatprep.subr.bf16.mxu0 0
    %121 = vmatpush1.bf16.msra.mxu0 0
    %122 = vmatprep.subr.bf16.mxu0 0
    %123 = vmatpush1.bf16.msra.mxu0 0
    %124 = vmatprep.subr.bf16.mxu0 0
    %125 = vmatpush1.bf16.msra.mxu0 0
    %126 = vmatprep.subr.bf16.mxu0 0
    %127 = vmatpush1.bf16.msra.mxu0 0
    %128 = vmatprep.subr.bf16.mxu0 0
    %129 = vmatpush1.bf16.msra.mxu0 0
    %130 = vmatprep.subr.bf16.mxu0 0
    %131 = vmatpush1.bf16.msra.mxu0 0
    %132 = vmatprep.mubr.bf16.mxu0 0
    %133 = vmatmul.mubr.bf16.gmra.mrb[0].mxu0 %v50
    %v134 = vpop.f32.mrb[0].mxu0
    %v135 = vadd.f32 0.0, %v134
    %v136 = vpop.f32.mrb[0].mxu0
    %v137 = vpop.f32.mrb[0].mxu0
    %v138 = vadd.f32 0.0, %v137
    %v139 = vpop.f32.mrb[0].mxu0
    %140 = vdwg.mxu0
    %v141 = vadd.f32 %v26, %v135
    %v142 = vadd.f32 %v27, %v138
    %vm143 = vcmask 261120
    %144 = vst.msk [vmem:[#allocation2] sm:$0xff] %vm143, %v141
    %145 = vst.msk [vmem:[#allocation2 + $0x8] sm:$0xff] %vm143, %v142
    // Predicated region
    $region22: #{encoder_layer_forward.7} parent=1 // pred_check
      %p146 = pneg %p19
    $region23: #{encoder_layer_forward.7} parent=1 // pred_check_branch
      %148 = sbr.rel (%p146) target = $region25
    $region24: #{encoder_layer_forward.7} parent=1 // pred_region
      %v149 = vld [vmem:[#allocation2] sm:$0xff]
      %v150 = vld [vmem:[#allocation2 + $0x8] sm:$0xff]
      %v151 = vld [vmem:[%s2] sm:$0x1]
      %v153 = vlaneseq
      %v154 = vshrl.u32 %v153, 7
      %v155 = vsub.s32 0, %v154
      %v156 = vrot.slane %v151, %v155
      %v158 = vadd.f32 %v149, %v156
      %v159 = vadd.f32 %v150, %v156
      %v160 = vld [vmem:[%s3] sm:$0xff]
      %v161 = vld [vmem:[%s3 + $0x8] sm:$0xff]
      %v162 = vadd.f32 %v158, %v160
      %v163 = vadd.f32 %v159, %v161
      %164 = vst.msk [vmem:[#allocation3] sm:$0xff] %vm143, %v162
      %165 = vst.msk [vmem:[#allocation3 + $0x8] sm:$0xff] %vm143, %v163
    $region25: #{encoder_layer_forward.7} parent=1 // pred_fallthru
      _
    // Predicated region
    $region26: #{encoder_layer_forward.7} parent=1 // pred_check
      _
    $region27: #{encoder_layer_forward.7} parent=1 // pred_check_branch
      %167 = sbr.rel (0) target = $region29
    $region28: #{encoder_layer_forward.7} parent=1 // pred_region
      %s169 = ssub.s32 256, 256
      %170 = vsyncadd [#allocation4], %s169
      %s171 = sshll.u32 [#allocation3], 4
      %s172 = int_to_ptr.vmem [resolvable:$true] %s171
      %177 = dma.vmem_to_hbm [thread:$0]  %s172, 256, %s4, [#allocation4], 128, 128, 8
    $region29: #{encoder_layer_forward.7} parent=1 // pred_fallthru
      _
    // Predicated region
    $region30: #{encoder_layer_forward.7} parent=1 // pred_check
      _
    $region31: #{encoder_layer_forward.7} parent=1 // pred_check_branch
      %179 = sbr.rel (0) target = $region33
    $region32: #{encoder_layer_forward.7} parent=1 // pred_region
      %180 = dma.done [#allocation4], 256
    $region33: #{encoder_layer_forward.7} parent=1 // pred_fallthru
      _
    %181 = vsyncpa [#allocation4], 1

// kernel: encoder_layer_forward.5
$region0: #{encoder_layer_forward.5}
  #allocation0 [shape = 'u32[]', space=smem, size = 0x4, offset = 0x4, fixed_abs, tag = 'smem constant byte address 0x4 - core index']
  #allocation1 [shape = 'u32[144,128]{1,0:T(1,128)}', space=vmem, size = 0x12000, scoped, tag = 'internal scratch']
  #allocation2 [shape = 'f32[4,8,1]{2,1,0:T(8,128)}', space=vmem, size = 0x4000, scoped, tag = 'scratch operand']
  #allocation3 [shape = 'f32[4,8,1]{2,1,0:T(8,128)}', space=vmem, size = 0x4000, scoped, tag = 'scratch operand']
  #allocation4 [shape = 'f32[4,8,8]{2,1,0:T(8,128)}', space=vmem, size = 0x4000, scoped, tag = 'scratch operand']
  %s0 = inlined_call_operand.vmem [shape: bf16[2,4,8,8], index: 0, kind: input, shape index: {}]
  %s1 = inlined_call_operand.vmem [shape: bf16[2,4,8,8], index: 1, kind: input, shape index: {}]
  %s2 = inlined_call_operand.vmem [shape: bf16[2,4,8,8], index: 2, kind: input, shape index: {}]
  %s3 = inlined_call_operand.vmem [shape: bf16[2,4,8,8], index: 3, kind: input, shape index: {}]
  %s4 = inlined_call_operand.vmem [shape: bf16[32,32], index: 4, kind: input, shape index: {}]
  %s5 = inlined_call_operand.vmem [shape: f32[1,32], index: 5, kind: input, shape index: {}]
  %s6 = inlined_call_operand.vmem [shape: f32[2,8,32], index: 6, kind: input, shape index: {}]
  %s7 = inlined_call_operand.vmem [shape: f32[2,8,32], index: 7, kind: output, shape index: {}]
  %s8 = sld [smem:[#allocation0]]
  $region69: #{encoder_layer_forward.5} parent=0
    _
  %s10 = ssub.s32 1, %s8
  %s11 = scalar_select 0, %s10, %s8
  loop: start=0, step=1, limit=4
  $region2: #{encoder_layer_forward.5} parent=0 // loop_pre_header
    _
  $region3: #{encoder_layer_forward.5} parent=0 // loop_header
    %s13 = sphi 0, %s17
    %p14 = scmp.ge.s32.totalorder %s13, 4
    %s20 = sphi 0, %s39
    %s21 = sphi 0, %s35
    %s22 = sphi 0, %s31
    %s23 = sphi 0, %s20
    %s24 = sphi 0, %s21
    %s25 = sphi 0, %s22
    %s26 = sphi 0, %s23
    %s27 = sphi 0, %s24
    %s28 = sphi 0, %s25
    %s44 = sphi 0, %s46
    %s47 = sphi 0, %s44
    %s48 = sphi 0, %s47
    %s64 = sphi 0, %s48
    %s72 = sphi 0, %s74
    %s75 = sphi 0, %s72
    %s76 = sphi 0, %s75
    %s92 = sphi 0, %s76
    %s100 = sphi 0, %s102
    %s103 = sphi 0, %s100
    %s104 = sphi 0, %s103
    %s120 = sphi 0, %s104
    %s130 = sphi 0, %s132
    %s133 = sphi 0, %s130
    %s134 = sphi 0, %s133
    %s150 = sphi 0, %s134
    %s154 = sphi 0, %s154
    %s156 = sphi 0, %s154
    %s157 = sphi 0, %s156
    %s171 = sphi 0, %s157
    %s175 = sphi 0, %s175
    %s177 = sphi 0, %s175
    %s178 = sphi 0, %s177
    %s192 = sphi 0, %s178
    %s200 = sphi 0, %s202
    %s203 = sphi 0, %s200
    %s204 = sphi 0, %s203
    %s220 = sphi 0, %s204
    %s228 = sphi 0, %s230
    %s231 = sphi 0, %s228
    %s232 = sphi 0, %s231
    %s248 = sphi 0, %s232
  $region4: #{encoder_layer_forward.5} parent=0 // loop_header_branch
    %16 = sbr.rel (%p14) target = $region8
  $region5: #{encoder_layer_forward.5} parent=0 // loop_body
    %s18 = ssub.s32 %s13, 1
    %s19 = ssub.s32 %s13, 2
    %s29 = sadd.s32 1, %s22
    %p30 = scmp.ge.s32.totalorder %s29, 1
    %s31 = scalar_select %p30, 0, %s29
    %s32 = sadd.s32 1, %s21
    %s33 = scalar_select %p30, %s32, %s21
    %p34 = scmp.ge.s32.totalorder %s33, 1
    %s35 = scalar_select %p34, 0, %s33
    %s36 = sadd.s32 1, %s20
    %s37 = scalar_select %p34, %s36, %s20
    %p38 = scmp.ge.s32.totalorder %s37, 2
    %s39 = scalar_select %p38, 0, %s37
    %s40 = ssub.s32 %s20, %s39
    %s41 = ssub.s32 %s21, %s35
    %s42 = sor.u32 %s40, %s41
    %p43 = scmp.eq.s32.totalorder %s42, 0
    %s45 = sadd.s32 %s44, 1
    %s46 = scalar_select %p43, %s44, %s45
    %p49 = pneg %p43
    %p50 = scmp.eq.s32.totalorder %s13, 1
    %p51 = por %p49, %p50
    %p52 = scmp.ne.s32.totalorder %s44, %s47
    %p53 = scmp.eq.s32.totalorder %s13, 0
    %p54 = por %p52, %p53
    %p55 = scmp.ne.s32.totalorder %s44, %s47
    %p56 = scmp.eq.s32.totalorder %s18, 1
    %p57 = por %p55, %p56
    %p58 = scmp.ne.s32.totalorder %s47, %s48
    %p59 = scmp.eq.s32.totalorder %s18, 0
    %p60 = por %p58, %p59
    %p61 = scmp.ne.s32.totalorder %s47, %s48
    %p62 = scmp.eq.s32.totalorder %s19, 1
    %p63 = por %p61, %p62
    %p65 = scmp.ne.s32.totalorder %s48, %s64
    %p66 = scmp.eq.s32.totalorder %s19, 0
    %p67 = por %p65, %p66
    %s68 = ssub.s32 %s20, %s39
    %s69 = ssub.s32 %s22, %s31
    %s70 = sor.u32 %s68, %s69
    %p71 = scmp.eq.s32.totalorder %s70, 0
    %s73 = sadd.s32 %s72, 1
    %s74 = scalar_select %p71, %s72, %s73
    %p77 = pneg %p71
    %p78 = scmp.eq.s32.totalorder %s13, 1
    %p79 = por %p77, %p78
    %p80 = scmp.ne.s32.totalorder %s72, %s75
    %p81 = scmp.eq.s32.totalorder %s13, 0
    %p82 = por %p80, %p81
    %p83 = scmp.ne.s32.totalorder %s72, %s75
    %p84 = scmp.eq.s32.totalorder %s18, 1
    %p85 = por %p83, %p84
    %p86 = scmp.ne.s32.totalorder %s75, %s76
    %p87 = scmp.eq.s32.totalorder %s18, 0
    %p88 = por %p86, %p87
    %p89 = scmp.ne.s32.totalorder %s75, %s76
    %p90 = scmp.eq.s32.totalorder %s19, 1
    %p91 = por %p89, %p90
    %p93 = scmp.ne.s32.totalorder %s76, %s92
    %p94 = scmp.eq.s32.totalorder %s19, 0
    %p95 = por %p93, %p94
    %s96 = ssub.s32 %s20, %s39
    %s97 = ssub.s32 %s22, %s31
    %s98 = sor.u32 %s96, %s97
    %p99 = scmp.eq.s32.totalorder %s98, 0
    %s101 = sadd.s32 %s100, 1
    %s102 = scalar_select %p99, %s100, %s101
    %p105 = pneg %p99
    %p106 = scmp.eq.s32.totalorder %s13, 1
    %p107 = por %p105, %p106
    %p108 = scmp.ne.s32.totalorder %s100, %s103
    %p109 = scmp.eq.s32.totalorder %s13, 0
    %p110 = por %p108, %p109
    %p111 = scmp.ne.s32.totalorder %s100, %s103
    %p112 = scmp.eq.s32.totalorder %s18, 1
    %p113 = por %p111, %p112
    %p114 = scmp.ne.s32.totalorder %s103, %s104
    %p115 = scmp.eq.s32.totalorder %s18, 0
    %p116 = por %p114, %p115
    %p117 = scmp.ne.s32.totalorder %s103, %s104
    %p118 = scmp.eq.s32.totalorder %s19, 1
    %p119 = por %p117, %p118
    %p121 = scmp.ne.s32.totalorder %s104, %s120
    %p122 = scmp.eq.s32.totalorder %s19, 0
    %p123 = por %p121, %p122
    %s124 = ssub.s32 %s20, %s39
    %s125 = ssub.s32 %s21, %s35
    %s126 = sor.u32 %s124, %s125
    %s127 = ssub.s32 %s22, %s31
    %s128 = sor.u32 %s126, %s127
    %p129 = scmp.eq.s32.totalorder %s128, 0
    %s131 = sadd.s32 %s130, 1
    %s132 = scalar_select %p129, %s130, %s131
    %p135 = pneg %p129
    %p136 = scmp.eq.s32.totalorder %s13, 1
    %p137 = por %p135, %p136
    %p138 = scmp.ne.s32.totalorder %s130, %s133
    %p139 = scmp.eq.s32.totalorder %s13, 0
    %p140 = por %p138, %p139
    %p141 = scmp.ne.s32.totalorder %s130, %s133
    %p142 = scmp.eq.s32.totalorder %s18, 1
    %p143 = por %p141, %p142
    %p144 = scmp.ne.s32.totalorder %s133, %s134
    %p145 = scmp.eq.s32.totalorder %s18, 0
    %p146 = por %p144, %p145
    %p147 = scmp.ne.s32.totalorder %s133, %s134
    %p148 = scmp.eq.s32.totalorder %s19, 1
    %p149 = por %p147, %p148
    %p151 = scmp.ne.s32.totalorder %s134, %s150
    %p152 = scmp.eq.s32.totalorder %s19, 0
    %p153 = por %p151, %p152
    %s155 = sadd.s32 %s154, 1
    %p158 = scmp.eq.s32.totalorder %s13, 1
    %p159 = scmp.ne.s32.totalorder %s154, %s156
    %p160 = scmp.eq.s32.totalorder %s13, 0
    %p161 = por %p159, %p160
    %p162 = scmp.ne.s32.totalorder %s154, %s156
    %p163 = scmp.eq.s32.totalorder %s18, 1
    %p164 = por %p162, %p163
    %p165 = scmp.ne.s32.totalorder %s156, %s157
    %p166 = scmp.eq.s32.totalorder %s18, 0
    %p167 = por %p165, %p166
    %p168 = scmp.ne.s32.totalorder %s156, %s157
    %p169 = scmp.eq.s32.totalorder %s19, 1
    %p170 = por %p168, %p169
    %p172 = scmp.ne.s32.totalorder %s157, %s171
    %p173 = scmp.eq.s32.totalorder %s19, 0
    %p174 = por %p172, %p173
    %s176 = sadd.s32 %s175, 1
    %p179 = scmp.eq.s32.totalorder %s13, 1
    %p180 = scmp.ne.s32.totalorder %s175, %s177
    %p181 = scmp.eq.s32.totalorder %s13, 0
    %p182 = por %p180, %p181
    %p183 = scmp.ne.s32.totalorder %s175, %s177
    %p184 = scmp.eq.s32.totalorder %s18, 1
    %p185 = por %p183, %p184
    %p186 = scmp.ne.s32.totalorder %s177, %s178
    %p187 = scmp.eq.s32.totalorder %s18, 0
    %p188 = por %p186, %p187
    %p189 = scmp.ne.s32.totalorder %s177, %s178
    %p190 = scmp.eq.s32.totalorder %s19, 1
    %p191 = por %p189, %p190
    %p193 = scmp.ne.s32.totalorder %s178, %s192
    %p194 = scmp.eq.s32.totalorder %s19, 0
    %p195 = por %p193, %p194
    %s196 = ssub.s32 %s20, %s39
    %s197 = ssub.s32 %s21, %s35
    %s198 = sor.u32 %s196, %s197
    %p199 = scmp.eq.s32.totalorder %s198, 0
    %s201 = sadd.s32 %s200, 1
    %s202 = scalar_select %p199, %s200, %s201
    %p205 = pneg %p199
    %p206 = scmp.eq.s32.totalorder %s13, 1
    %p207 = por %p205, %p206
    %p208 = scmp.ne.s32.totalorder %s200, %s203
    %p209 = scmp.eq.s32.totalorder %s13, 0
    %p210 = por %p208, %p209
    %p211 = scmp.ne.s32.totalorder %s200, %s203
    %p212 = scmp.eq.s32.totalorder %s18, 1
    %p213 = por %p211, %p212
    %p214 = scmp.ne.s32.totalorder %s203, %s204
    %p215 = scmp.eq.s32.totalorder %s18, 0
    %p216 = por %p214, %p215
    %p217 = scmp.ne.s32.totalorder %s203, %s204
    %p218 = scmp.eq.s32.totalorder %s19, 1
    %p219 = por %p217, %p218
    %p221 = scmp.ne.s32.totalorder %s204, %s220
    %p222 = scmp.eq.s32.totalorder %s19, 0
    %p223 = por %p221, %p222
    %s224 = ssub.s32 %s20, %s39
    %s225 = ssub.s32 %s21, %s35
    %s226 = sor.u32 %s224, %s225
    %p227 = scmp.eq.s32.totalorder %s226, 0
    %s229 = sadd.s32 %s228, 1
    %s230 = scalar_select %p227, %s228, %s229
    %p233 = pneg %p227
    %p234 = scmp.eq.s32.totalorder %s13, 1
    %p235 = por %p233, %p234
    %p236 = scmp.ne.s32.totalorder %s228, %s231
    %p237 = scmp.eq.s32.totalorder %s13, 0
    %p238 = por %p236, %p237
    %p239 = scmp.ne.s32.totalorder %s228, %s231
    %p240 = scmp.eq.s32.totalorder %s18, 1
    %p241 = por %p239, %p240
    %p242 = scmp.ne.s32.totalorder %s231, %s232
    %p243 = scmp.eq.s32.totalorder %s18, 0
    %p244 = por %p242, %p243
    %p245 = scmp.ne.s32.totalorder %s231, %s232
    %p246 = scmp.eq.s32.totalorder %s19, 1
    %p247 = por %p245, %p246
    %p249 = scmp.ne.s32.totalorder %s232, %s248
    %p250 = scmp.eq.s32.totalorder %s19, 0
    %p251 = por %p249, %p250
    %p252 = scmp.le.s32.totalorder 1, %s13
    %p253 = scmp.lt.s32.totalorder %s13, 3
    %p254 = pnand %p252, %p253
    %p255 = pneg %p254
    // Predicated region
    $region9: #{encoder_layer_forward.5} parent=5 // pred_check
      _
    $region10: #{encoder_layer_forward.5} parent=5 // pred_check_branch
      %257 = sbr.rel (%p254) target = $region12
    $region11: #{encoder_layer_forward.5} parent=5 // pred_region
      %s258 = ssub.s32 %s13, 1
      // Predicated region
      $region13: #{encoder_layer_forward.5} parent=11 // pred_check
        %p259 = pneg %p167
      $region14: #{encoder_layer_forward.5} parent=11 // pred_check_branch
        %261 = sbr.rel (%p259) target = $region16
      $region15: #{encoder_layer_forward.5} parent=11 // pred_region
        _
      $region16: #{encoder_layer_forward.5} parent=11 // pred_fallthru
        _
      // Predicated region
      $region17: #{encoder_layer_forward.5} parent=11 // pred_check
        %p262 = pneg %p188
      $region18: #{encoder_layer_forward.5} parent=11 // pred_check_branch
        %264 = sbr.rel (%p262) target = $region20
      $region19: #{encoder_layer_forward.5} parent=11 // pred_region
        _
      $region20: #{encoder_layer_forward.5} parent=11 // pred_fallthru
        _
    $region12: #{encoder_layer_forward.5} parent=5 // pred_fallthru
      _
    %p265 = scmp.lt.s32.totalorder %s13, 2
    // Predicated region
    $region21: #{encoder_layer_forward.5} parent=5 // pred_check
      %p266 = pneg %p265
    $region22: #{encoder_layer_forward.5} parent=5 // pred_check_branch
      %268 = sbr.rel (%p266) target = $region24
    $region23: #{encoder_layer_forward.5} parent=5 // pred_region
      // Predicated region
      $region25: #{encoder_layer_forward.5} parent=23 // pred_check
        %p269 = pneg %p54
      $region26: #{encoder_layer_forward.5} parent=23 // pred_check_branch
        %271 = sbr.rel (%p269) target = $region28
      $region27: #{encoder_layer_forward.5} parent=23 // pred_region
        %p272 = scmp.lt.s32.totalorder %s20, 1
        %s273 = scalar_select %p272, %s20, 1
        %p274 = scmp.lt.s32.totalorder %s21, 0
        %s275 = scalar_select %p274, %s21, 0
        %s276 = smul.addr %s273, 4
        %s277 = sadd.s32 %s275, %s276
        %s278 = smul.addr %s277, 4
        %s279 = scalar_lea.vmem %s0, %s278
      $region28: #{encoder_layer_forward.5} parent=23 // pred_fallthru
        _
      // Predicated region
      $region29: #{encoder_layer_forward.5} parent=23 // pred_check
        %p280 = pneg %p82
      $region30: #{encoder_layer_forward.5} parent=23 // pred_check_branch
        %282 = sbr.rel (%p280) target = $region32
      $region31: #{encoder_layer_forward.5} parent=23 // pred_region
        %p283 = scmp.lt.s32.totalorder %s20, 1
        %s284 = scalar_select %p283, %s20, 1
        %p285 = scmp.lt.s32.totalorder %s22, 0
        %s286 = scalar_select %p285, %s22, 0
        %s287 = smul.addr %s284, 4
        %s288 = sadd.s32 %s286, %s287
        %s289 = smul.addr %s288, 4
        %s290 = scalar_lea.vmem %s1, %s289
      $region32: #{encoder_layer_forward.5} parent=23 // pred_fallthru
        _
      // Predicated region
      $region33: #{encoder_layer_forward.5} parent=23 // pred_check
        %p291 = pneg %p110
      $region34: #{encoder_layer_forward.5} parent=23 // pred_check_branch
        %293 = sbr.rel (%p291) target = $region36
      $region35: #{encoder_layer_forward.5} parent=23 // pred_region
        %p294 = scmp.lt.s32.totalorder %s20, 1
        %s295 = scalar_select %p294, %s20, 1
        %p296 = scmp.lt.s32.totalorder %s22, 0
        %s297 = scalar_select %p296, %s22, 0
        %s298 = smul.addr %s295, 4
        %s299 = sadd.s32 %s297, %s298
        %s300 = smul.addr %s299, 4
        %s301 = scalar_lea.vmem %s2, %s300
      $region36: #{encoder_layer_forward.5} parent=23 // pred_fallthru
        _
      // Predicated region
      $region37: #{encoder_layer_forward.5} parent=23 // pred_check
        %p302 = pneg %p140
      $region38: #{encoder_layer_forward.5} parent=23 // pred_check_branch
        %304 = sbr.rel (%p302) target = $region40
      $region39: #{encoder_layer_forward.5} parent=23 // pred_region
        %p305 = scmp.lt.s32.totalorder %s20, 1
        %s306 = scalar_select %p305, %s20, 1
        %p307 = scmp.lt.s32.totalorder %s21, 0
        %s308 = scalar_select %p307, %s21, 0
        %p309 = scmp.lt.s32.totalorder %s22, 0
        %s310 = scalar_select %p309, %s22, 0
        %s311 = sadd.s32 %s310, %s308
        %s312 = smul.addr %s306, 4
        %s313 = sadd.s32 %s311, %s312
        %s314 = smul.addr %s313, 4
        %s315 = scalar_lea.vmem %s3, %s314
      $region40: #{encoder_layer_forward.5} parent=23 // pred_fallthru
        _
      // Predicated region
      $region41: #{encoder_layer_forward.5} parent=23 // pred_check
        %p316 = pneg %p210
      $region42: #{encoder_layer_forward.5} parent=23 // pred_check_branch
        %318 = sbr.rel (%p316) target = $region44
      $region43: #{encoder_layer_forward.5} parent=23 // pred_region
        %p319 = scmp.lt.s32.totalorder %s20, 1
        %s320 = scalar_select %p319, %s20, 1
        %p321 = scmp.lt.s32.totalorder %s21, 0
        %s322 = scalar_select %p321, %s21, 0
        %s323 = sadd.s32 %s322, %s320
        %s324 = smul.addr %s323, 8
        %s325 = scalar_lea.vmem %s6, %s324
      $region44: #{encoder_layer_forward.5} parent=23 // pred_fallthru
        _
    $region24: #{encoder_layer_forward.5} parent=5 // pred_fallthru
      _
    %p326 = scmp.le.s32.totalorder 1, %s13
    %p327 = scmp.lt.s32.totalorder %s13, 3
    %p328 = pnand %p326, %p327
    %p329 = pneg %p328
    // Predicated region
    $region45: #{encoder_layer_forward.5} parent=5 // pred_check
      _
    $region46: #{encoder_layer_forward.5} parent=5 // pred_check_branch
      %331 = sbr.rel (%p328) target = $region48
    $region47: #{encoder_layer_forward.5} parent=5 // pred_region
      %s332 = ssub.s32 %s13, 1
      %p333 = scmp.lt.s32.totalorder %s23, 1
      %s334 = scalar_select %p333, %s23, 1
      %p335 = scmp.lt.s32.totalorder %s24, 0
      %s336 = scalar_select %p335, %s24, 0
      %s337 = smul.addr %s334, 4
      %s338 = sadd.s32 %s336, %s337
      %s339 = smul.addr %s338, 4
      %s340 = scalar_lea.vmem %s0, %s339
      %p341 = pneg %p60
      %p342 = pneg %p57
      %p343 = scmp.lt.s32.totalorder %s23, 1
      %s344 = scalar_select %p343, %s23, 1
      %p345 = scmp.lt.s32.totalorder %s25, 0
      %s346 = scalar_select %p345, %s25, 0
      %s347 = smul.addr %s344, 4
      %s348 = sadd.s32 %s346, %s347
      %s349 = smul.addr %s348, 4
      %s350 = scalar_lea.vmem %s1, %s349
      %p351 = pneg %p88
      %p352 = pneg %p85
      %p353 = scmp.lt.s32.totalorder %s23, 1
      %s354 = scalar_select %p353, %s23, 1
      %p355 = scmp.lt.s32.totalorder %s25, 0
      %s356 = scalar_select %p355, %s25, 0
      %s357 = smul.addr %s354, 4
      %s358 = sadd.s32 %s356, %s357
      %s359 = smul.addr %s358, 4
      %s360 = scalar_lea.vmem %s2, %s359
      %p361 = pneg %p116
      %p362 = pneg %p113
      %p363 = scmp.lt.s32.totalorder %s23, 1
      %s364 = scalar_select %p363, %s23, 1
      %p365 = scmp.lt.s32.totalorder %s24, 0
      %s366 = scalar_select %p365, %s24, 0
      %p367 = scmp.lt.s32.totalorder %s25, 0
      %s368 = scalar_select %p367, %s25, 0
      %s369 = sadd.s32 %s368, %s366
      %s370 = smul.addr %s364, 4
      %s371 = sadd.s32 %s369, %s370
      %s372 = smul.addr %s371, 4
      %s373 = scalar_lea.vmem %s3, %s372
      %p374 = pneg %p146
      %p375 = pneg %p143
      %p376 = pneg %p167
      %p377 = pneg %p164
      %p378 = pneg %p188
      %p379 = pneg %p185
      %p380 = scmp.lt.s32.totalorder %s23, 1
      %s381 = scalar_select %p380, %s23, 1
      %p382 = scmp.lt.s32.totalorder %s24, 0
      %s383 = scalar_select %p382, %s24, 0
      %s384 = sadd.s32 %s383, %s381
      %s385 = smul.addr %s384, 8
      %s386 = scalar_lea.vmem %s6, %s385
      %p387 = pneg %p216
      %p388 = pneg %p213
      %p389 = pneg %p244
      %p390 = pneg %p241
      %p391 = scmp.lt.s32.totalorder %s23, 1
      %s392 = scalar_select %p391, %s23, 1
      %p393 = scmp.lt.s32.totalorder %s24, 0
      %s394 = scalar_select %p393, %s24, 0
      %s395 = sadd.s32 %s394, %s392
      %s396 = smul.addr %s395, 8
      %s397 = scalar_lea.vmem %s7, %s396
      %p398 = scmp.lt.s32.totalorder %s23, 1
      %s399 = scalar_select %p398, %s23, 1
      %p400 = scmp.lt.s32.totalorder %s24, 0
      %s401 = scalar_select %p400, %s24, 0
      %s402 = smul.addr %s399, 4
      %s403 = sadd.s32 %s401, %s402
      %s404 = smul.addr %s403, 4
      %s405 = scalar_lea.vmem %s0, %s404
      %p406 = scmp.lt.s32.totalorder %s23, 1
      %s407 = scalar_select %p406, %s23, 1
      %p408 = scmp.lt.s32.totalorder %s25, 0
      %s409 = scalar_select %p408, %s25, 0
      %s410 = smul.addr %s407, 4
      %s411 = sadd.s32 %s409, %s410
      %s412 = smul.addr %s411, 4
      %s413 = scalar_lea.vmem %s1, %s412
      %p414 = scmp.lt.s32.totalorder %s23, 1
      %s415 = scalar_select %p414, %s23, 1
      %p416 = scmp.lt.s32.totalorder %s25, 0
      %s417 = scalar_select %p416, %s25, 0
      %s418 = smul.addr %s415, 4
      %s419 = sadd.s32 %s417, %s418
      %s420 = smul.addr %s419, 4
      %s421 = scalar_lea.vmem %s2, %s420
      %p422 = scmp.lt.s32.totalorder %s23, 1
      %s423 = scalar_select %p422, %s23, 1
      %p424 = scmp.lt.s32.totalorder %s24, 0
      %s425 = scalar_select %p424, %s24, 0
      %p426 = scmp.lt.s32.totalorder %s25, 0
      %s427 = scalar_select %p426, %s25, 0
      %s428 = sadd.s32 %s427, %s425
      %s429 = smul.addr %s423, 4
      %s430 = sadd.s32 %s428, %s429
      %s431 = smul.addr %s430, 4
      %s432 = scalar_lea.vmem %s3, %s431
      %p433 = scmp.lt.s32.totalorder %s23, 1
      %s434 = scalar_select %p433, %s23, 1
      %p435 = scmp.lt.s32.totalorder %s24, 0
      %s436 = scalar_select %p435, %s24, 0
      %s437 = sadd.s32 %s436, %s434
      %s438 = smul.addr %s437, 8
      %s439 = scalar_lea.vmem %s6, %s438
      %p440 = scmp.lt.s32.totalorder %s23, 1
      %s441 = scalar_select %p440, %s23, 1
      %p442 = scmp.lt.s32.totalorder %s24, 0
      %s443 = scalar_select %p442, %s24, 0
      %s444 = sadd.s32 %s443, %s441
      %s445 = smul.addr %s444, 8
      %s446 = scalar_lea.vmem %s7, %s445
      %p448 = scmp.eq.s32.totalorder %s25, 0
      // Predicated region
      $region49: #{encoder_layer_forward.5} parent=47 // pred_check
        %p449 = pneg %p448
      $region50: #{encoder_layer_forward.5} parent=47 // pred_check_branch
        %451 = sbr.rel (%p449) target = $region52
      $region51: #{encoder_layer_forward.5} parent=47 // pred_region
        %vm452 = vcmask 7168
        %453 = vst.msk [vmem:[#allocation2] sm:$0xff] %vm452, -1e+30
        %454 = vst.msk [vmem:[#allocation2 + $0x8] sm:$0xff] %vm452, -1e+30
        %455 = vst.msk [vmem:[#allocation2 + $0x10] sm:$0xff] %vm452, -1e+30
        %456 = vst.msk [vmem:[#allocation2 + $0x18] sm:$0xff] %vm452, -1e+30
        %457 = vst.msk [vmem:[#allocation3] sm:$0xff] %vm452, 0.0
        %458 = vst.msk [vmem:[#allocation3 + $0x8] sm:$0xff] %vm452, 0.0
        %459 = vst.msk [vmem:[#allocation3 + $0x10] sm:$0xff] %vm452, 0.0
        %460 = vst.msk [vmem:[#allocation3 + $0x18] sm:$0xff] %vm452, 0.0
        %vm461 = vcmask 64512
        %462 = vst.msk [vmem:[#allocation4] sm:$0xff] %vm461, 0.0
        %463 = vst.msk [vmem:[#allocation4 + $0x8] sm:$0xff] %vm461, 0.0
        %464 = vst.msk [vmem:[#allocation4 + $0x10] sm:$0xff] %vm461, 0.0
        %465 = vst.msk [vmem:[#allocation4 + $0x18] sm:$0xff] %vm461, 0.0
      $region52: #{encoder_layer_forward.5} parent=47 // pred_fallthru
        _
      %v466 = vld [vmem:[%s405] sm:$0xf]
      %v467 = vld [vmem:[%s405 + $0x4] sm:$0xf]
      %v468 = vld [vmem:[%s405 + $0x8] sm:$0xf]
      %v469 = vld [vmem:[%s405 + $0xc] sm:$0xf]
      %v470 = vld [vmem:[%s413] sm:$0xf]
      %v471 = vld [vmem:[%s413 + $0x4] sm:$0xf]
      %v472 = vld [vmem:[%s413 + $0x8] sm:$0xf]
      %v473 = vld [vmem:[%s413 + $0xc] sm:$0xf]
      %v474 = vld [vmem:[%s421] sm:$0xf]
      %v475 = vld [vmem:[%s421 + $0x4] sm:$0xf]
      %v476 = vld [vmem:[%s421 + $0x8] sm:$0xf]
      %v477 = vld [vmem:[%s421 + $0xc] sm:$0xf]
      %vm478 = vcmask 64512
      %v480 = vsel %vm478, %v466, 0
      %v483 = vsel %vm478, %v470, 0
      %485 = vmatprep.subr.bf16.mxu0 0
      %486 = vmatpush1.bf16.xpose.msra.mxu0 %v483
      %487 = vmatprep.subr.bf16.mxu0 0
      %488 = vmatpush1.bf16.xpose.msra.mxu0 0
      %489 = vmatprep.subr.bf16.mxu0 0
      %490 = vmatpush1.bf16.xpose.msra.mxu0 0
      %491 = vmatprep.subr.bf16.mxu0 0
      %492 = vmatpush1.bf16.xpose.msra.mxu0 0
      %493 = vmatprep.subr.bf16.mxu0 0
      %494 = vmatpush1.bf16.xpose.msra.mxu0 0
      %495 = vmatprep.subr.bf16.mxu0 0
      %496 = vmatpush1.bf16.xpose.msra.mxu0 0
      %497 = vmatprep.subr.bf16.mxu0 0
      %498 = vmatpush1.bf16.xpose.msra.mxu0 0
      %499 = vmatprep.subr.bf16.mxu0 0
      %500 = vmatpush1.bf16.xpose.msra.mxu0 0
      %501 = vmatprep.subr.bf16.mxu0 0
      %502 = vmatpush1.bf16.xpose.msra.mxu0 0
      %503 = vmatprep.subr.bf16.mxu0 0
      %504 = vmatpush1.bf16.xpose.msra.mxu0 0
      %505 = vmatprep.subr.bf16.mxu0 0
      %506 = vmatpush1.bf16.xpose.msra.mxu0 0
      %507 = vmatprep.subr.bf16.mxu0 0
      %508 = vmatpush1.bf16.xpose.msra.mxu0 0
      %509 = vmatprep.subr.bf16.mxu0 0
      %510 = vmatpush1.bf16.xpose.msra.mxu0 0
      %511 = vmatprep.subr.bf16.mxu0 0
      %512 = vmatpush1.bf16.xpose.msra.mxu0 0
      %513 = vmatprep.subr.bf16.mxu0 0
      %514 = vmatpush1.bf16.xpose.msra.mxu0 0
      %515 = vmatprep.subr.bf16.mxu0 0
      %516 = vmatpush1.bf16.xpose.msra.mxu0 0
      %517 = vmatprep.mubr.bf16.mxu0 0
      %518 = vmatmul.mubr.bf16.gmra.mrb[0].mxu0 %v480
      %v519 = vpop.f32.mrb[0].mxu0
      %v520 = vadd.f32 0.0, %v519
      %v521 = vpop.f32.mrb[0].mxu0
      %v522 = vpop.f32.mrb[0].mxu0
      %v523 = vpop.f32.mrb[0].mxu0
      %524 = vdwg.mxu0
      %v525 = vmul.f32 %v520, 0.35355338
      %v526 = vld [vmem:[%s432] sm:$0xf]
      %v527 = vunpack.c.l.bf16 %v526
      %v528 = vadd.f32 %v525, %v527
      %v529 = vld [vmem:[#allocation2] sm:$0xff]
      %v530 = vsel %vm478, %v528, -inf
      %531 = vmax.xlane.f32.xlu0 %v530
      %v532 = vpop.xlane.xlu0 %531
      %v533 = vmax.f32 %v529, %v532
      %v534 = vsub.f32 %v529, %v533
      %v535 = vmul.f32 %v534, 1.442695
      %v536 = vpow.pop %v535
      %538 = vset.pattern.permute.xlu0 0
      %539 = vperm.xlu0 %538, %v533
      %v540 = vpop.permute.xlu0 %539
      %v542 = vsub.f32 %v528, %v540
      %v543 = vmul.f32 %v542, 1.442695
      %v544 = vpow.pop %v543
      %v545 = vld [vmem:[#allocation3] sm:$0xff]
      %v546 = vmul.f32 %v536, %v545
      %v547 = vsel %vm478, %v544, 0.0
      %548 = vadd.xlane.f32.xlu0 %v547
      %v549 = vpop.xlane.xlu0 %548
      %v550 = vadd.f32 %v546, %v549
      %vm551 = vcmask 7168
      %552 = vst.msk [vmem:[#allocation3] sm:$0xff] %vm551, %v550
      %v553 = vld [vmem:[#allocation4] sm:$0xff]
      %555 = vset.pattern.permute.xlu0 0
      %556 = vperm.xlu0 %555, %v536
      %v557 = vpop.permute.xlu0 %556
      %v559 = vmul.f32 %v557, %v553
      %v560 = vpack.c.bf16 %v544, %v544
      %v562 = vsel %vm478, %v560, 0
      %vm564 = vcmask 1043456
      %v566 = vsel %vm564, %v474, 0
      %568 = vmatprep.subr.bf16.mxu0 0
      %569 = vmatpush1.bf16.msra.mxu0 %v566
      %570 = vmatprep.subr.bf16.mxu0 0
      %571 = vmatpush1.bf16.msra.mxu0 0
      %572 = vmatprep.subr.bf16.mxu0 0
      %573 = vmatpush1.bf16.msra.mxu0 0
      %574 = vmatprep.subr.bf16.mxu0 0
      %575 = vmatpush1.bf16.msra.mxu0 0
      %576 = vmatprep.subr.bf16.mxu0 0
      %577 = vmatpush1.bf16.msra.mxu0 0
      %578 = vmatprep.subr.bf16.mxu0 0
      %579 = vmatpush1.bf16.msra.mxu0 0
      %580 = vmatprep.subr.bf16.mxu0 0
      %581 = vmatpush1.bf16.msra.mxu0 0
      %582 = vmatprep.subr.bf16.mxu0 0
      %583 = vmatpush1.bf16.msra.mxu0 0
      %584 = vmatprep.subr.bf16.mxu0 0
      %585 = vmatpush1.bf16.msra.mxu0 0
      %586 = vmatprep.subr.bf16.mxu0 0
      %587 = vmatpush1.bf16.msra.mxu0 0
      %588 = vmatprep.subr.bf16.mxu0 0
      %589 = vmatpush1.bf16.msra.mxu0 0
      %590 = vmatprep.subr.bf16.mxu0 0
      %591 = vmatpush1.bf16.msra.mxu0 0
      %592 = vmatprep.subr.bf16.mxu0 0
      %593 = vmatpush1.bf16.msra.mxu0 0
      %594 = vmatprep.subr.bf16.mxu0 0
      %595 = vmatpush1.bf16.msra.mxu0 0
      %596 = vmatprep.subr.bf16.mxu0 0
      %597 = vmatpush1.bf16.msra.mxu0 0
      %598 = vmatprep.subr.bf16.mxu0 0
      %599 = vmatpush1.bf16.msra.mxu0 0
      %600 = vmatprep.mubr.bf16.mxu0 0
      %601 = vmatmul.mubr.bf16.gmra.mrb[0].mxu0 %v562
      %v602 = vpop.f32.mrb[0].mxu0
      %v603 = vadd.f32 0.0, %v602
      %v604 = vpop.f32.mrb[0].mxu0
      %v605 = vpop.f32.mrb[0].mxu0
      %v606 = vpop.f32.mrb[0].mxu0
      %607 = vdwg.mxu0
      %v608 = vadd.f32 %v559, %v603
      %609 = vst.msk [vmem:[#allocation4] sm:$0xff] %vm478, %v608
      %610 = vst.msk [vmem:[#allocation2] sm:$0xff] %vm551, %v533
      %v612 = vsel %vm478, %v467, 0
      %v615 = vsel %vm478, %v471, 0
      %617 = vmatprep.subr.bf16.mxu0 0
      %618 = vmatpush1.bf16.xpose.msra.mxu0 %v615
      %619 = vmatprep.subr.bf16.mxu0 0
      %620 = vmatpush1.bf16.xpose.msra.mxu0 0
      %621 = vmatprep.subr.bf16.mxu0 0
      %622 = vmatpush1.bf16.xpose.msra.mxu0 0
      %623 = vmatprep.subr.bf16.mxu0 0
      %624 = vmatpush1.bf16.xpose.msra.mxu0 0
      %625 = vmatprep.subr.bf16.mxu0 0
      %626 = vmatpush1.bf16.xpose.msra.mxu0 0
      %627 = vmatprep.subr.bf16.mxu0 0
      %628 = vmatpush1.bf16.xpose.msra.mxu0 0
      %629 = vmatprep.subr.bf16.mxu0 0
      %630 = vmatpush1.bf16.xpose.msra.mxu0 0
      %631 = vmatprep.subr.bf16.mxu0 0
      %632 = vmatpush1.bf16.xpose.msra.mxu0 0
      %633 = vmatprep.subr.bf16.mxu0 0
      %634 = vmatpush1.bf16.xpose.msra.mxu0 0
      %635 = vmatprep.subr.bf16.mxu0 0
      %636 = vmatpush1.bf16.xpose.msra.mxu0 0
      %637 = vmatprep.subr.bf16.mxu0 0
      %638 = vmatpush1.bf16.xpose.msra.mxu0 0
      %639 = vmatprep.subr.bf16.mxu0 0
      %640 = vmatpush1.bf16.xpose.msra.mxu0 0
      %641 = vmatprep.subr.bf16.mxu0 0
      %642 = vmatpush1.bf16.xpose.msra.mxu0 0
      %643 = vmatprep.subr.bf16.mxu0 0
      %644 = vmatpush1.bf16.xpose.msra.mxu0 0
      %645 = vmatprep.subr.bf16.mxu0 0
      %646 = vmatpush1.bf16.xpose.msra.mxu0 0
      %647 = vmatprep.subr.bf16.mxu0 0
      %648 = vmatpush1.bf16.xpose.msra.mxu0 0
      %649 = vmatprep.mubr.bf16.mxu0 0
      %650 = vmatmul.mubr.bf16.gmra.mrb[0].mxu0 %v612
      %v651 = vpop.f32.mrb[0].mxu0
      %v652 = vadd.f32 0.0, %v651
      %v653 = vpop.f32.mrb[0].mxu0
      %v654 = vpop.f32.mrb[0].mxu0
      %v655 = vpop.f32.mrb[0].mxu0
      %656 = vdwg.mxu0
      %v657 = vmul.f32 %v652, 0.35355338
      %s658 = scalar_lea.vmem %s432, 4
      %v659 = vld [vmem:[%s658] sm:$0xf]
      %v660 = vunpack.c.l.bf16 %v659
      %v661 = vadd.f32 %v657, %v660
      %s662 = scalar_lea.vmem [#allocation2], 8
      %v663 = vld [vmem:[%s662] sm:$0xff]
      %v664 = vsel %vm478, %v661, -inf
      %665 = vmax.xlane.f32.xlu0 %v664
      %v666 = vpop.xlane.xlu0 %665
      %v667 = vmax.f32 %v663, %v666
      %v668 = vsub.f32 %v663, %v667
      %v669 = vmul.f32 %v668, 1.442695
      %v670 = vpow.pop %v669
      %672 = vset.pattern.permute.xlu0 0
      %673 = vperm.xlu0 %672, %v667
      %v674 = vpop.permute.xlu0 %673
      %v676 = vsub.f32 %v661, %v674
      %v677 = vmul.f32 %v676, 1.442695
      %v678 = vpow.pop %v677
      %s679 = scalar_lea.vmem [#allocation3], 8
      %v680 = vld [vmem:[%s679] sm:$0xff]
      %v681 = vmul.f32 %v670, %v680
      %v682 = vsel %vm478, %v678, 0.0
      %683 = vadd.xlane.f32.xlu0 %v682
      %v684 = vpop.xlane.xlu0 %683
      %v685 = vadd.f32 %v681, %v684
      %686 = vst.msk [vmem:[%s679] sm:$0xff] %vm551, %v685
      %s687 = scalar_lea.vmem [#allocation4], 8
      %v688 = vld [vmem:[%s687] sm:$0xff]
      %690 = vset.pattern.permute.xlu0 0
      %691 = vperm.xlu0 %690, %v670
      %v692 = vpop.permute.xlu0 %691
      %v694 = vmul.f32 %v692, %v688
      %v695 = vpack.c.bf16 %v678, %v678
      %v697 = vsel %vm478, %v695, 0
      %v700 = vsel %vm564, %v475, 0
      %702 = vmatprep.subr.bf16.mxu0 0
      %703 = vmatpush1.bf16.msra.mxu0 %v700
      %704 = vmatprep.subr.bf16.mxu0 0
      %705 = vmatpush1.bf16.msra.mxu0 0
      %706 = vmatprep.subr.bf16.mxu0 0
      %707 = vmatpush1.bf16.msra.mxu0 0
      %708 = vmatprep.subr.bf16.mxu0 0
      %709 = vmatpush1.bf16.msra.mxu0 0
      %710 = vmatprep.subr.bf16.mxu0 0
      %711 = vmatpush1.bf16.msra.mxu0 0
      %712 = vmatprep.subr.bf16.mxu0 0
      %713 = vmatpush1.bf16.msra.mxu0 0
      %714 = vmatprep.subr.bf16.mxu0 0
      %715 = vmatpush1.bf16.msra.mxu0 0
      %716 = vmatprep.subr.bf16.mxu0 0
      %717 = vmatpush1.bf16.msra.mxu0 0
      %718 = vmatprep.subr.bf16.mxu0 0
      %719 = vmatpush1.bf16.msra.mxu0 0
      %720 = vmatprep.subr.bf16.mxu0 0
      %721 = vmatpush1.bf16.msra.mxu0 0
      %722 = vmatprep.subr.bf16.mxu0 0
      %723 = vmatpush1.bf16.msra.mxu0 0
      %724 = vmatprep.subr.bf16.mxu0 0
      %725 = vmatpush1.bf16.msra.mxu0 0
      %726 = vmatprep.subr.bf16.mxu0 0
      %727 = vmatpush1.bf16.msra.mxu0 0
      %728 = vmatprep.subr.bf16.mxu0 0
      %729 = vmatpush1.bf16.msra.mxu0 0
      %730 = vmatprep.subr.bf16.mxu0 0
      %731 = vmatpush1.bf16.msra.mxu0 0
      %732 = vmatprep.subr.bf16.mxu0 0
      %733 = vmatpush1.bf16.msra.mxu0 0
      %734 = vmatprep.mubr.bf16.mxu0 0
      %735 = vmatmul.mubr.bf16.gmra.mrb[0].mxu0 %v697
      %v736 = vpop.f32.mrb[0].mxu0
      %v737 = vadd.f32 0.0, %v736
      %v738 = vpop.f32.mrb[0].mxu0
      %v739 = vpop.f32.mrb[0].mxu0
      %v740 = vpop.f32.mrb[0].mxu0
      %741 = vdwg.mxu0
      %v742 = vadd.f32 %v694, %v737
      %743 = vst.msk [vmem:[%s687] sm:$0xff] %vm478, %v742
      %744 = vst.msk [vmem:[%s662] sm:$0xff] %vm551, %v667
      %v746 = vsel %vm478, %v468, 0
      %v749 = vsel %vm478, %v472, 0
      %751 = vmatprep.subr.bf16.mxu0 0
      %752 = vmatpush1.bf16.xpose.msra.mxu0 %v749
      %753 = vmatprep.subr.bf16.mxu0 0
      %754 = vmatpush1.bf16.xpose.msra.mxu0 0
      %755 = vmatprep.subr.bf16.mxu0 0
      %756 = vmatpush1.bf16.xpose.msra.mxu0 0
      %757 = vmatprep.subr.bf16.mxu0 0
      %758 = vmatpush1.bf16.xpose.msra.mxu0 0
      %759 = vmatprep.subr.bf16.mxu0 0
      %760 = vmatpush1.bf16.xpose.msra.mxu0 0
      %761 = vmatprep.subr.bf16.mxu0 0
      %762 = vmatpush1.bf16.xpose.msra.mxu0 0
      %763 = vmatprep.subr.bf16.mxu0 0
      %764 = vmatpush1.bf16.xpose.msra.mxu0 0
      %765 = vmatprep.subr.bf16.mxu0 0
      %766 = vmatpush1.bf16.xpose.msra.mxu0 0
      %767 = vmatprep.subr.bf16.mxu0 0
      %768 = vmatpush1.bf16.xpose.msra.mxu0 0
      %769 = vmatprep.subr.bf16.mxu0 0
      %770 = vmatpush1.bf16.xpose.msra.mxu0 0
      %771 = vmatprep.subr.bf16.mxu0 0
      %772 = vmatpush1.bf16.xpose.msra.mxu0 0
      %773 = vmatprep.subr.bf16.mxu0 0
      %774 = vmatpush1.bf16.xpose.msra.mxu0 0
      %775 = vmatprep.subr.bf16.mxu0 0
      %776 = vmatpush1.bf16.xpose.msra.mxu0 0
      %777 = vmatprep.subr.bf16.mxu0 0
      %778 = vmatpush1.bf16.xpose.msra.mxu0 0
      %779 = vmatprep.subr.bf16.mxu0 0
      %780 = vmatpush1.bf16.xpose.msra.mxu0 0
      %781 = vmatprep.subr.bf16.mxu0 0
      %782 = vmatpush1.bf16.xpose.msra.mxu0 0
      %783 = vmatprep.mubr.bf16.mxu0 0
      %784 = vmatmul.mubr.bf16.gmra.mrb[0].mxu0 %v746
      %v785 = vpop.f32.mrb[0].mxu0
      %v786 = vadd.f32 0.0, %v785
      %v787 = vpop.f32.mrb[0].mxu0
      %v788 = vpop.f32.mrb[0].mxu0
      %v789 = vpop.f32.mrb[0].mxu0
      %790 = vdwg.mxu0
      %v791 = vmul.f32 %v786, 0.35355338
      %s792 = scalar_lea.vmem %s432, 8
      %v793 = vld [vmem:[%s792] sm:$0xf]
      %v794 = vunpack.c.l.bf16 %v793
      %v795 = vadd.f32 %v791, %v794
      %s796 = scalar_lea.vmem [#allocation2], 16
      %v797 = vld [vmem:[%s796] sm:$0xff]
      %v798 = vsel %vm478, %v795, -inf
      %799 = vmax.xlane.f32.xlu0 %v798
      %v800 = vpop.xlane.xlu0 %799
      %v801 = vmax.f32 %v797, %v800
      %v802 = vsub.f32 %v797, %v801
      %v803 = vmul.f32 %v802, 1.442695
      %v804 = vpow.pop %v803
      %806 = vset.pattern.permute.xlu0 0
      %807 = vperm.xlu0 %806, %v801
      %v808 = vpop.permute.xlu0 %807
      %v810 = vsub.f32 %v795, %v808
      %v811 = vmul.f32 %v810, 1.442695
      %v812 = vpow.pop %v811
      %s813 = scalar_lea.vmem [#allocation3], 16
      %v814 = vld [vmem:[%s813] sm:$0xff]
      %v815 = vmul.f32 %v804, %v814
      %v816 = vsel %vm478, %v812, 0.0
      %817 = vadd.xlane.f32.xlu0 %v816
      %v818 = vpop.xlane.xlu0 %817
      %v819 = vadd.f32 %v815, %v818
      %820 = vst.msk [vmem:[%s813] sm:$0xff] %vm551, %v819
      %s821 = scalar_lea.vmem [#allocation4], 16
      %v822 = vld [vmem:[%s821] sm:$0xff]
      %824 = vset.pattern.permute.xlu0 0
      %825 = vperm.xlu0 %824, %v804
      %v826 = vpop.permute.xlu0 %825
      %v828 = vmul.f32 %v826, %v822
      %v829 = vpack.c.bf16 %v812, %v812
      %v831 = vsel %vm478, %v829, 0
      %v834 = vsel %vm564, %v476, 0
      %836 = vmatprep.subr.bf16.mxu0 0
      %837 = vmatpush1.bf16.msra.mxu0 %v834
      %838 = vmatprep.subr.bf16.mxu0 0
      %839 = vmatpush1.bf16.msra.mxu0 0
      %840 = vmatprep.subr.bf16.mxu0 0
      %841 = vmatpush1.bf16.msra.mxu0 0
      %842 = vmatprep.subr.bf16.mxu0 0
      %843 = vmatpush1.bf16.msra.mxu0 0
      %844 = vmatprep.subr.bf16.mxu0 0
      %845 = vmatpush1.bf16.msra.mxu0 0
      %846 = vmatprep.subr.bf16.mxu0 0
      %847 = vmatpush1.bf16.msra.mxu0 0
      %848 = vmatprep.subr.bf16.mxu0 0
      %849 = vmatpush1.bf16.msra.mxu0 0
      %850 = vmatprep.subr.bf16.mxu0 0
      %851 = vmatpush1.bf16.msra.mxu0 0
      %852 = vmatprep.subr.bf16.mxu0 0
      %853 = vmatpush1.bf16.msra.mxu0 0
      %854 = vmatprep.subr.bf16.mxu0 0
      %855 = vmatpush1.bf16.msra.mxu0 0
      %856 = vmatprep.subr.bf16.mxu0 0
      %857 = vmatpush1.bf16.msra.mxu0 0
      %858 = vmatprep.subr.bf16.mxu0 0
      %859 = vmatpush1.bf16.msra.mxu0 0
      %860 = vmatprep.subr.bf16.mxu0 0
      %861 = vmatpush1.bf16.msra.mxu0 0
      %862 = vmatprep.subr.bf16.mxu0 0
      %863 = vmatpush1.bf16.msra.mxu0 0
      %864 = vmatprep.subr.bf16.mxu0 0
      %865 = vmatpush1.bf16.msra.mxu0 0
      %866 = vmatprep.subr.bf16.mxu0 0
      %867 = vmatpush1.bf16.msra.mxu0 0
      %868 = vmatprep.mubr.bf16.mxu0 0
      %869 = vmatmul.mubr.bf16.gmra.mrb[0].mxu0 %v831
      %v870 = vpop.f32.mrb[0].mxu0
      %v871 = vadd.f32 0.0, %v870
      %v872 = vpop.f32.mrb[0].mxu0
      %v873 = vpop.f32.mrb[0].mxu0
      %v874 = vpop.f32.mrb[0].mxu0
      %875 = vdwg.mxu0
      %v876 = vadd.f32 %v828, %v871
      %877 = vst.msk [vmem:[%s821] sm:$0xff] %vm478, %v876
      %878 = vst.msk [vmem:[%s796] sm:$0xff] %vm551, %v801
      %v880 = vsel %vm478, %v469, 0
      %v883 = vsel %vm478, %v473, 0
      %885 = vmatprep.subr.bf16.mxu0 0
      %886 = vmatpush1.bf16.xpose.msra.mxu0 %v883
      %887 = vmatprep.subr.bf16.mxu0 0
      %888 = vmatpush1.bf16.xpose.msra.mxu0 0
      %889 = vmatprep.subr.bf16.mxu0 0
      %890 = vmatpush1.bf16.xpose.msra.mxu0 0
      %891 = vmatprep.subr.bf16.mxu0 0
      %892 = vmatpush1.bf16.xpose.msra.mxu0 0
      %893 = vmatprep.subr.bf16.mxu0 0
      %894 = vmatpush1.bf16.xpose.msra.mxu0 0
      %895 = vmatprep.subr.bf16.mxu0 0
      %896 = vmatpush1.bf16.xpose.msra.mxu0 0
      %897 = vmatprep.subr.bf16.mxu0 0
      %898 = vmatpush1.bf16.xpose.msra.mxu0 0
      %899 = vmatprep.subr.bf16.mxu0 0
      %900 = vmatpush1.bf16.xpose.msra.mxu0 0
      %901 = vmatprep.subr.bf16.mxu0 0
      %902 = vmatpush1.bf16.xpose.msra.mxu0 0
      %903 = vmatprep.subr.bf16.mxu0 0
      %904 = vmatpush1.bf16.xpose.msra.mxu0 0
      %905 = vmatprep.subr.bf16.mxu0 0
      %906 = vmatpush1.bf16.xpose.msra.mxu0 0
      %907 = vmatprep.subr.bf16.mxu0 0
      %908 = vmatpush1.bf16.xpose.msra.mxu0 0
      %909 = vmatprep.subr.bf16.mxu0 0
      %910 = vmatpush1.bf16.xpose.msra.mxu0 0
      %911 = vmatprep.subr.bf16.mxu0 0
      %912 = vmatpush1.bf16.xpose.msra.mxu0 0
      %913 = vmatprep.subr.bf16.mxu0 0
      %914 = vmatpush1.bf16.xpose.msra.mxu0 0
      %915 = vmatprep.subr.bf16.mxu0 0
      %916 = vmatpush1.bf16.xpose.msra.mxu0 0
      %917 = vmatprep.mubr.bf16.mxu0 0
      %918 = vmatmul.mubr.bf16.gmra.mrb[0].mxu0 %v880
      %v919 = vpop.f32.mrb[0].mxu0
      %v920 = vadd.f32 0.0, %v919
      %v921 = vpop.f32.mrb[0].mxu0
      %v922 = vpop.f32.mrb[0].mxu0
      %v923 = vpop.f32.mrb[0].mxu0
      %924 = vdwg.mxu0
      %v925 = vmul.f32 %v920, 0.35355338
      %s926 = scalar_lea.vmem %s432, 12
      %v927 = vld [vmem:[%s926] sm:$0xf]
      %v928 = vunpack.c.l.bf16 %v927
      %v929 = vadd.f32 %v925, %v928
      %s930 = scalar_lea.vmem [#allocation2], 24
      %v931 = vld [vmem:[%s930] sm:$0xff]
      %v932 = vsel %vm478, %v929, -inf
      %933 = vmax.xlane.f32.xlu0 %v932
      %v934 = vpop.xlane.xlu0 %933
      %v935 = vmax.f32 %v931, %v934
      %v936 = vsub.f32 %v931, %v935
      %v937 = vmul.f32 %v936, 1.442695
      %v938 = vpow.pop %v937
      %940 = vset.pattern.permute.xlu0 0
      %941 = vperm.xlu0 %940, %v935
      %v942 = vpop.permute.xlu0 %941
      %v944 = vsub.f32 %v929, %v942
      %v945 = vmul.f32 %v944, 1.442695
      %v946 = vpow.pop %v945
      %s947 = scalar_lea.vmem [#allocation3], 24
      %v948 = vld [vmem:[%s947] sm:$0xff]
      %v949 = vmul.f32 %v938, %v948
      %v950 = vsel %vm478, %v946, 0.0
      %951 = vadd.xlane.f32.xlu0 %v950
      %v952 = vpop.xlane.xlu0 %951
      %v953 = vadd.f32 %v949, %v952
      %954 = vst.msk [vmem:[%s947] sm:$0xff] %vm551, %v953
      %s955 = scalar_lea.vmem [#allocation4], 24
      %v956 = vld [vmem:[%s955] sm:$0xff]
      %958 = vset.pattern.permute.xlu0 0
      %959 = vperm.xlu0 %958, %v938
      %v960 = vpop.permute.xlu0 %959
      %v962 = vmul.f32 %v960, %v956
      %v963 = vpack.c.bf16 %v946, %v946
      %v965 = vsel %vm478, %v963, 0
      %v968 = vsel %vm564, %v477, 0
      %970 = vmatprep.subr.bf16.mxu0 0
      %971 = vmatpush1.bf16.msra.mxu0 %v968
      %972 = vmatprep.subr.bf16.mxu0 0
      %973 = vmatpush1.bf16.msra.mxu0 0
      %974 = vmatprep.subr.bf16.mxu0 0
      %975 = vmatpush1.bf16.msra.mxu0 0
      %976 = vmatprep.subr.bf16.mxu0 0
      %977 = vmatpush1.bf16.msra.mxu0 0
      %978 = vmatprep.subr.bf16.mxu0 0
      %979 = vmatpush1.bf16.msra.mxu0 0
      %980 = vmatprep.subr.bf16.mxu0 0
      %981 = vmatpush1.bf16.msra.mxu0 0
      %982 = vmatprep.subr.bf16.mxu0 0
      %983 = vmatpush1.bf16.msra.mxu0 0
      %984 = vmatprep.subr.bf16.mxu0 0
      %985 = vmatpush1.bf16.msra.mxu0 0
      %986 = vmatprep.subr.bf16.mxu0 0
      %987 = vmatpush1.bf16.msra.mxu0 0
      %988 = vmatprep.subr.bf16.mxu0 0
      %989 = vmatpush1.bf16.msra.mxu0 0
      %990 = vmatprep.subr.bf16.mxu0 0
      %991 = vmatpush1.bf16.msra.mxu0 0
      %992 = vmatprep.subr.bf16.mxu0 0
      %993 = vmatpush1.bf16.msra.mxu0 0
      %994 = vmatprep.subr.bf16.mxu0 0
      %995 = vmatpush1.bf16.msra.mxu0 0
      %996 = vmatprep.subr.bf16.mxu0 0
      %997 = vmatpush1.bf16.msra.mxu0 0
      %998 = vmatprep.subr.bf16.mxu0 0
      %999 = vmatpush1.bf16.msra.mxu0 0
      %1000 = vmatprep.subr.bf16.mxu0 0
      %1001 = vmatpush1.bf16.msra.mxu0 0
      %1002 = vmatprep.mubr.bf16.mxu0 0
      %1003 = vmatmul.mubr.bf16.gmra.mrb[0].mxu0 %v965
      %v1004 = vpop.f32.mrb[0].mxu0
      %v1005 = vadd.f32 0.0, %v1004
      %v1006 = vpop.f32.mrb[0].mxu0
      %v1007 = vpop.f32.mrb[0].mxu0
      %v1008 = vpop.f32.mrb[0].mxu0
      %1009 = vdwg.mxu0
      %v1010 = vadd.f32 %v962, %v1005
      %1011 = vst.msk [vmem:[%s955] sm:$0xff] %vm478, %v1010
      %1012 = vst.msk [vmem:[%s930] sm:$0xff] %vm551, %v935
      // Predicated region
      $region53: #{encoder_layer_forward.5} parent=47 // pred_check
        %p1013 = pneg %p448
      $region54: #{encoder_layer_forward.5} parent=47 // pred_check_branch
        %1015 = sbr.rel (%p1013) target = $region56
      $region55: #{encoder_layer_forward.5} parent=47 // pred_region
        %v1016 = vld [vmem:[#allocation3] sm:$0xff]
        %v1017 = vmax.f32 %v1016, 1e-30
        %v1018 = vrcp.pop %v1017
        %v1019 = vld [vmem:[#allocation4] sm:$0xff]
        %1021 = vset.pattern.permute.xlu0 0
        %1022 = vperm.xlu0 %1021, %v1018
        %v1023 = vpop.permute.xlu0 %1022
        %v1025 = vmul.f32 %v1019, %v1023
        %v1026 = vld [vmem:[%s679] sm:$0xff]
        %v1027 = vmax.f32 %v1026, 1e-30
        %v1028 = vrcp.pop %v1027
        %v1029 = vld [vmem:[%s687] sm:$0xff]
        %1031 = vset.pattern.permute.xlu0 0
        %1032 = vperm.xlu0 %1031, %v1028
        %v1033 = vpop.permute.xlu0 %1032
        %v1035 = vmul.f32 %v1029, %v1033
        %v1036 = vld [vmem:[%s813] sm:$0xff]
        %v1037 = vmax.f32 %v1036, 1e-30
        %v1038 = vrcp.pop %v1037
        %v1039 = vld [vmem:[%s821] sm:$0xff]
        %1041 = vset.pattern.permute.xlu0 0
        %1042 = vperm.xlu0 %1041, %v1038
        %v1043 = vpop.permute.xlu0 %1042
        %v1045 = vmul.f32 %v1039, %v1043
        %v1046 = vld [vmem:[%s947] sm:$0xff]
        %v1047 = vmax.f32 %v1046, 1e-30
        %v1048 = vrcp.pop %v1047
        %v1049 = vld [vmem:[%s955] sm:$0xff]
        %1051 = vset.pattern.permute.xlu0 0
        %1052 = vperm.xlu0 %1051, %v1048
        %v1053 = vpop.permute.xlu0 %1052
        %v1055 = vmul.f32 %v1049, %v1053
        %1057 = vrot.lane.b32.xlu0 %v1035, 8
        %v1058 = vpop.permute.xlu0 %1057
        %1061 = vrot.lane.b32.xlu0 %v1045, 16
        %v1062 = vpop.permute.xlu0 %1061
        %1065 = vrot.lane.b32.xlu0 %v1055, 24
        %v1066 = vpop.permute.xlu0 %1065
        %v1068 = vsel %vm478, %v1025, %v1058
        %vm1069 = vcmask 130048
        %v1070 = vsel %vm1069, %v1068, %v1062
        %vm1071 = vcmask 195584
        %v1072 = vsel %vm1071, %v1070, %v1066
        %v1073 = vld [vmem:[%s439] sm:$0xff]
        %v1074 = vld [vmem:[%s5] sm:$0x1]
        %v1076 = vlaneseq
        %v1077 = vshrl.u32 %v1076, 7
        %v1078 = vsub.s32 0, %v1077
        %v1079 = vrot.slane %v1074, %v1078
        %v1081 = vadd.f32 %v1073, %v1079
        %v1082 = vpack.c.bf16 %v1072, %v1072
        %v1083 = vld [vmem:[%s4] sm:$0xf]
        %v1084 = vld [vmem:[%s4 + $0x4] sm:$0xf]
        %v1085 = vld [vmem:[%s4 + $0x8] sm:$0xf]
        %v1086 = vld [vmem:[%s4 + $0xc] sm:$0xf]
        %v1091 = vunpack.c.l.b16 %v1083
        %v1092 = vunpack.c.l.b16 %v1084
        %v1093 = vunpack.c.l.b16 %v1085
        %v1094 = vunpack.c.l.b16 %v1086
        %v1095 = vpack.c.b16 %v1092, %v1091
        %v1096 = vpack.c.b16 %v1094, %v1093
        %vm1099 = vcmask 261120
        %v1101 = vsel %vm1099, %v1082, 0
        %1103 = vmatprep.subr.bf16.mxu0 0
        %1104 = vmatpush1.bf16.msra.mxu0 %v1095
        %1105 = vmatprep.subr.bf16.mxu0 0
        %1106 = vmatpush1.bf16.msra.mxu0 %v1096
        %1107 = vmatprep.subr.bf16.mxu0 0
        %1108 = vmatpush1.bf16.msra.mxu0 0
        %1109 = vmatprep.subr.bf16.mxu0 0
        %1110 = vmatpush1.bf16.msra.mxu0 0
        %1111 = vmatprep.subr.bf16.mxu0 0
        %1112 = vmatpush1.bf16.msra.mxu0 0
        %1113 = vmatprep.subr.bf16.mxu0 0
        %1114 = vmatpush1.bf16.msra.mxu0 0
        %1115 = vmatprep.subr.bf16.mxu0 0
        %1116 = vmatpush1.bf16.msra.mxu0 0
        %1117 = vmatprep.subr.bf16.mxu0 0
        %1118 = vmatpush1.bf16.msra.mxu0 0
        %1119 = vmatprep.subr.bf16.mxu0 0
        %1120 = vmatpush1.bf16.msra.mxu0 0
        %1121 = vmatprep.subr.bf16.mxu0 0
        %1122 = vmatpush1.bf16.msra.mxu0 0
        %1123 = vmatprep.subr.bf16.mxu0 0
        %1124 = vmatpush1.bf16.msra.mxu0 0
        %1125 = vmatprep.subr.bf16.mxu0 0
        %1126 = vmatpush1.bf16.msra.mxu0 0
        %1127 = vmatprep.subr.bf16.mxu0 0
        %1128 = vmatpush1.bf16.msra.mxu0 0
        %1129 = vmatprep.subr.bf16.mxu0 0
        %1130 = vmatpush1.bf16.msra.mxu0 0
        %1131 = vmatprep.subr.bf16.mxu0 0
        %1132 = vmatpush1.bf16.msra.mxu0 0
        %1133 = vmatprep.subr.bf16.mxu0 0
        %1134 = vmatpush1.bf16.msra.mxu0 0
        %1135 = vmatprep.mubr.bf16.mxu0 0
        %1136 = vmatmul.mubr.bf16.gmra.mrb[0].mxu0 %v1101
        %v1137 = vpop.f32.mrb[0].mxu0
        %v1138 = vadd.f32 0.0, %v1137
        %v1139 = vpop.f32.mrb[0].mxu0
        %v1140 = vpop.f32.mrb[0].mxu0
        %v1141 = vpop.f32.mrb[0].mxu0
        %1142 = vdwg.mxu0
        %v1143 = vadd.f32 %v1081, %v1138
        %1144 = vst.msk [vmem:[%s446] sm:$0xff] %vm1099, %v1143
      $region56: #{encoder_layer_forward.5} parent=47 // pred_fallthru
        _
      %p1145 = scmp.lt.s32.totalorder %s23, 1
      %s1146 = scalar_select %p1145, %s23, 1
      %p1147 = scmp.lt.s32.totalorder %s24, 0
      %s1148 = scalar_select %p1147, %s24, 0
      %s1149 = sadd.s32 %s1148, %s1146
      %s1150 = smul.addr %s1149, 8
      %s1151 = scalar_lea.vmem %s7, %s1150
      // Predicated region
      $region57: #{encoder_layer_forward.5} parent=47 // pred_check
        %p1152 = pneg %p241
      $region58: #{encoder_layer_forward.5} parent=47 // pred_check_branch
        %1154 = sbr.rel (%p1152) target = $region60
      $region59: #{encoder_layer_forward.5} parent=47 // pred_region
        _
      $region60: #{encoder_layer_forward.5} parent=47 // pred_fallthru
        _
    $region48: #{encoder_layer_forward.5} parent=5 // pred_fallthru
      _
    %p1155 = scmp.le.s32.totalorder 2, %s13
    // Predicated region
    $region61: #{encoder_layer_forward.5} parent=5 // pred_check
      %p1156 = pneg %p1155
    $region62: #{encoder_layer_forward.5} parent=5 // pred_check_branch
      %1158 = sbr.rel (%p1156) target = $region64
    $region63: #{encoder_layer_forward.5} parent=5 // pred_region
      %s1159 = ssub.s32 %s13, 2
      // Predicated region
      $region65: #{encoder_layer_forward.5} parent=63 // pred_check
        %p1160 = pneg %p247
      $region66: #{encoder_layer_forward.5} parent=63 // pred_check_branch
        %1162 = sbr.rel (%p1160) target = $region68
      $region67: #{encoder_layer_forward.5} parent=63 // pred_region
        %p1163 = scmp.lt.s32.totalorder %s26, 1
        %s1164 = scalar_select %p1163, %s26, 1
        %p1165 = scmp.lt.s32.totalorder %s27, 0
        %s1166 = scalar_select %p1165, %s27, 0
        %s1167 = sadd.s32 %s1166, %s1164
        %s1168 = smul.addr %s1167, 8
        %s1169 = scalar_lea.vmem %s7, %s1168
      $region68: #{encoder_layer_forward.5} parent=63 // pred_fallthru
        _
    $region64: #{encoder_layer_forward.5} parent=5 // pred_fallthru
      _
  $region6: #{encoder_layer_forward.5} parent=0 // loop_footer
    %s17 = sadd.s32 1, %s13
  $region7: #{encoder_layer_forward.5} parent=0 // loop_footer_branch
    %12 = sbr.rel target = $region3
  $region8: #{encoder_layer_forward.5} parent=0 // loop_exit
    _

</llo_original>
